<compile_context>
chip_gen: v7x
topology: tpu7x:2x2x1
jax: 0.10.0
libtpu: 0.0.40
codegen_flags: <defaults>
</compile_context>

<pallas_src>
import jax
import jax.numpy as jnp
from jax.experimental import pallas as pl
from jax.experimental.pallas import tpu as pltpu

IN_FEATURES = 28 * 28        # 784 (kept unpadded: equals full array dim)
HIDDEN = 128
OUT_FEATURES = 10
N_PAD = 128                  # lane-dense output (real logits are [:, :10])


def _round_up(x, m):
    return (x + m - 1) // m * m


def mlp_kernel(x_ref, w1_ref, b1_ref, w2_ref, b2_ref, o_ref):
    # x_ref:  (TM, 784) f32       w1_ref: (784, 128) bf16   b1_ref: (1, 128) f32
    # w2_ref: (128, 128) bf16     b2_ref: (1, 128) f32      o_ref:  (TM, 128) f32
    x = x_ref[...].astype(jnp.bfloat16)                        # VPU cast, in-kernel
    h = jnp.dot(x, w1_ref[...], preferred_element_type=jnp.float32)
    h = jnp.maximum(h + b1_ref[...], 0.0)                      # bias + ReLU (f32)
    y = jnp.dot(h.astype(jnp.bfloat16), w2_ref[...],
                preferred_element_type=jnp.float32)
    o_ref[...] = y + b2_ref[...]


def prepare_params(w1, b1, w2, b2):
    """One-time weight/bias preprocessing (hoisted out of the forward pass).

    w1: (784, 128), w2: (128, 10) stored as (fan_in, fan_out)."""
    w1_p = w1.astype(jnp.bfloat16)                                      # (784, 128)
    b1_p = b1.reshape(1, HIDDEN).astype(jnp.float32)                    # (1, 128)
    w2_p = jnp.pad(w2, ((0, 0), (0, N_PAD - OUT_FEATURES))
                   ).astype(jnp.bfloat16)                               # (128, 128)
    b2_p = jnp.pad(b2, (0, N_PAD - OUT_FEATURES)
                   ).reshape(1, N_PAD).astype(jnp.float32)              # (1, 128)
    return w1_p, b1_p, w2_p, b2_p


def mnist_mlp_forward(x_nchw, w1_p, b1_p, w2_p, b2_p, *, block_b=512,
                      return_padded=False):
    """x_nchw: (B, 1, 28, 28) float32 -> logits (B, 10) float32
    (or (b_pad, 128) padded logits if return_padded=True)."""
    B = x_nchw.shape[0]
    x2d = x_nchw.reshape(B, IN_FEATURES)          # nn.Flatten(); stays f32

    # Tile selection: minimal batch padding; keep grid >= 2 for moderate B so
    # the "parallel" batch axis actually splits across the two v7x TensorCores.
    num_tiles = pl.cdiv(B, block_b)
    if B >= 16:
        num_tiles = max(num_tiles, 2)
    tm = _round_up(pl.cdiv(B, num_tiles), 8)
    b_pad = num_tiles * tm
    if b_pad != B:
        x2d = jnp.pad(x2d, ((0, b_pad - B), (0, 0)))   # at most 8*num_tiles-1 rows

    out_padded = pl.pallas_call(
        mlp_kernel,
        out_shape=jax.ShapeDtypeStruct((b_pad, N_PAD), jnp.float32),
        grid_spec=pl.GridSpec(
            grid=(num_tiles,),
            in_specs=[
                pl.BlockSpec((tm, IN_FEATURES), lambda i: (i, 0)),       # x tile
                pl.BlockSpec((IN_FEATURES, HIDDEN), lambda i: (0, 0)),   # w1 (resident)
                pl.BlockSpec((1, HIDDEN), lambda i: (0, 0)),             # b1 (resident)
                pl.BlockSpec((HIDDEN, N_PAD), lambda i: (0, 0)),         # w2 (resident)
                pl.BlockSpec((1, N_PAD), lambda i: (0, 0)),              # b2 (resident)
            ],
            out_specs=pl.BlockSpec((tm, N_PAD), lambda i: (i, 0)),
        ),
        compiler_params=pltpu.CompilerParams(
            # batch tiles are independent -> shard across the 2 TCs on v7x
            dimension_semantics=("parallel",),
        ),
    )(x2d, w1_p, b1_p, w2_p, b2_p)

    if return_padded:
        return out_padded                      # consumer can tolerate padding
    return out_padded[:B, :OUT_FEATURES]


def init_params(key):
    """Deterministic init mimicking nn.Linear default (uniform +-1/sqrt(fan_in)).

    Weights are stored as (fan_in, fan_out)."""
    k1, k2, k3, k4 = jax.random.split(key, 4)
    bound1 = 1.0 / jnp.sqrt(jnp.float32(IN_FEATURES))
    bound2 = 1.0 / jnp.sqrt(jnp.float32(HIDDEN))
    w1 = jax.random.uniform(k1, (IN_FEATURES, HIDDEN), jnp.float32,
                            minval=-bound1, maxval=bound1)
    b1 = jax.random.uniform(k2, (HIDDEN,), jnp.float32,
                            minval=-bound1, maxval=bound1)
    w2 = jax.random.uniform(k3, (HIDDEN, OUT_FEATURES), jnp.float32,
                            minval=-bound2, maxval=bound2)
    b2 = jax.random.uniform(k4, (OUT_FEATURES,), jnp.float32,
                            minval=-bound2, maxval=bound2)
    return w1, b1, w2, b2


if __name__ == "__main__":
    key = jax.random.PRNGKey(0)
    k_x, k_p = jax.random.split(key)

    # B=384 exercises the multi-tile grid (two 192-row tiles, zero batch
    # padding with the new tm selection); still a tiny problem.
    B = 384
    x = jax.random.normal(k_x, (B, 1, 28, 28), jnp.float32)   # NCHW like torch
    w1, b1, w2, b2 = init_params(k_p)
    w1_p, b1_p, w2_p, b2_p = prepare_params(w1, b1, w2, b2)   # hoisted, one-time

    out = mnist_mlp_forward(x, w1_p, b1_p, w2_p, b2_p)
    out = jax.block_until_ready(out)

    # Pure-JAX f32 reference for sanity (kernel uses bf16 operands + f32
    # accumulation, so allow a modest absolute tolerance).
    x2d = x.reshape(B, IN_FEATURES)
    ref = jnp.maximum(x2d @ w1 + b1, 0.0) @ w2 + b2
    assert out.shape == (B, OUT_FEATURES)
    max_err = jnp.max(jnp.abs(out - ref))
    assert max_err < 5e-2, f"max abs err too large: {max_err}"

    print("KERNEL_OK")
</pallas_src>

<mosaic_0001>
module attributes {stable_mosaic.version = 11 : i64} {
  func.func @mlp_kernel(%arg0: i32, %arg1: memref<192x784xf32, #tpu.memory_space<vmem>>, %arg2: memref<784x128xbf16, #tpu.memory_space<vmem>>, %arg3: memref<1x128xf32, #tpu.memory_space<vmem>>, %arg4: memref<128x128xbf16, #tpu.memory_space<vmem>>, %arg5: memref<1x128xf32, #tpu.memory_space<vmem>>, %arg6: memref<192x128xf32, #tpu.memory_space<vmem>>) attributes {dimension_semantics = [#tpu.dimension_semantics<parallel>], iteration_bounds = array<i64: 2>, scalar_prefetch = 0 : i64, scratch_operands = 0 : i64, tpu.core_type = #tpu.core_type<tc>, window_params = [{transform_indices = @transform_0, window_bounds = array<i64: 192, 784>}, {pipeline_mode = #tpu.pipeline_mode<synchronous>, transform_indices = @transform_1, window_bounds = array<i64: 784, 128>}, {pipeline_mode = #tpu.pipeline_mode<synchronous>, transform_indices = @transform_2, window_bounds = array<i64: 1, 128>}, {pipeline_mode = #tpu.pipeline_mode<synchronous>, transform_indices = @transform_3, window_bounds = array<i64: 128, 128>}, {pipeline_mode = #tpu.pipeline_mode<synchronous>, transform_indices = @transform_4, window_bounds = array<i64: 1, 128>}, {transform_indices = @transform_5, window_bounds = array<i64: 192, 128>}]} {
    %c0 = arith.constant 0 : index
    %c0_0 = arith.constant 0 : index
    %0 = vector.load %arg1[%c0, %c0_0] : memref<192x784xf32, #tpu.memory_space<vmem>>, vector<192x784xf32>
    %1 = arith.truncf %0 : vector<192x784xf32> to vector<192x784xbf16>
    %c0_1 = arith.constant 0 : index
    %c0_2 = arith.constant 0 : index
    %2 = vector.load %arg2[%c0_1, %c0_2] : memref<784x128xbf16, #tpu.memory_space<vmem>>, vector<784x128xbf16>
    %cst = arith.constant dense<0.000000e+00> : vector<192x128xf32>
    %3 = tpu.matmul %1, %2, %cst {dimension_numbers = #tpu.dot_dimension_numbers<[1], [0], [0], [1], [0, 0, 1, 1], [], []>} : vector<192x784xbf16>, vector<784x128xbf16>, vector<192x128xf32> -> vector<192x128xf32>
    %c0_3 = arith.constant 0 : index
    %c0_4 = arith.constant 0 : index
    %4 = vector.load %arg3[%c0_3, %c0_4] : memref<1x128xf32, #tpu.memory_space<vmem>>, vector<1x128xf32>
    %5 = vector.broadcast %4 : vector<1x128xf32> to vector<192x128xf32>
    %6 = arith.addf %3, %5 : vector<192x128xf32>
    %cst_5 = arith.constant 0.000000e+00 : f32
    %7 = vector.broadcast %cst_5 : f32 to vector<192x128xf32>
    %8 = arith.maximumf %6, %7 : vector<192x128xf32>
    %9 = arith.truncf %8 : vector<192x128xf32> to vector<192x128xbf16>
    %c0_6 = arith.constant 0 : index
    %c0_7 = arith.constant 0 : index
    %10 = vector.load %arg4[%c0_6, %c0_7] : memref<128x128xbf16, #tpu.memory_space<vmem>>, vector<128x128xbf16>
    %cst_8 = arith.constant dense<0.000000e+00> : vector<192x128xf32>
    %11 = tpu.matmul %9, %10, %cst_8 {dimension_numbers = #tpu.dot_dimension_numbers<[1], [0], [0], [1], [0, 0, 1, 1], [], []>} : vector<192x128xbf16>, vector<128x128xbf16>, vector<192x128xf32> -> vector<192x128xf32>
    %c0_9 = arith.constant 0 : index
    %c0_10 = arith.constant 0 : index
    %12 = vector.load %arg5[%c0_9, %c0_10] : memref<1x128xf32, #tpu.memory_space<vmem>>, vector<1x128xf32>
    %13 = vector.broadcast %12 : vector<1x128xf32> to vector<192x128xf32>
    %14 = arith.addf %11, %13 : vector<192x128xf32>
    %c0_11 = arith.constant 0 : index
    %c0_12 = arith.constant 0 : index
    %15 = vector.load %arg6[%c0_11, %c0_12] : memref<192x128xf32, #tpu.memory_space<vmem>>, vector<192x128xf32>
    tpu.vector_store %arg6[%c0_11, %c0_12], %14 {strides = array<i32>} : memref<192x128xf32, #tpu.memory_space<vmem>>, vector<192x128xf32>,
    return
  }
  func.func @transform_0(%arg0: i32) -> (i32, i32) {
    %c0_i32 = arith.constant 0 : i32
    %c0_i32_0 = arith.constant 0 : i32
    return %arg0, %c0_i32 : i32, i32
  }
  func.func @transform_1(%arg0: i32) -> (i32, i32) {
    %c0_i32 = arith.constant 0 : i32
    %c0_i32_0 = arith.constant 0 : i32
    %c0_i32_1 = arith.constant 0 : i32
    return %c0_i32, %c0_i32_0 : i32, i32
  }
  func.func @transform_2(%arg0: i32) -> (i32, i32) {
    %c0_i32 = arith.constant 0 : i32
    %c0_i32_0 = arith.constant 0 : i32
    %c0_i32_1 = arith.constant 0 : i32
    return %c0_i32, %c0_i32_0 : i32, i32
  }
  func.func @transform_3(%arg0: i32) -> (i32, i32) {
    %c0_i32 = arith.constant 0 : i32
    %c0_i32_0 = arith.constant 0 : i32
    %c0_i32_1 = arith.constant 0 : i32
    return %c0_i32, %c0_i32_0 : i32, i32
  }
  func.func @transform_4(%arg0: i32) -> (i32, i32) {
    %c0_i32 = arith.constant 0 : i32
    %c0_i32_0 = arith.constant 0 : i32
    %c0_i32_1 = arith.constant 0 : i32
    return %c0_i32, %c0_i32_0 : i32, i32
  }
  func.func @transform_5(%arg0: i32) -> (i32, i32) {
    %c0_i32 = arith.constant 0 : i32
    %c0_i32_0 = arith.constant 0 : i32
    return %arg0, %c0_i32 : i32, i32
  }
}

</mosaic_0001>

<llo_original>
// kernel: tpu_custom_call.1
$region0: #{tpu_custom_call.1}
  #allocation0 [shape = 'u32[]', space=smem, size = 0x4, offset = 0x4, fixed_abs, tag = 'smem constant byte address 0x4 - core index']
  #allocation1 [shape = 'u32[144,128]{1,0:T(1,128)}', space=vmem, size = 0x12000, scoped, tag = 'internal scratch']
  %s0 = inlined_call_operand.vmem [shape: f32[384,784], index: 0, kind: input, shape index: {}]
  %s1 = inlined_call_operand.vmem [shape: bf16[784,128], index: 1, kind: input, shape index: {}]
  %s2 = inlined_call_operand.vmem [shape: f32[1,128], index: 2, kind: input, shape index: {}]
  %s3 = inlined_call_operand.vmem [shape: bf16[128,128], index: 3, kind: input, shape index: {}]
  %s4 = inlined_call_operand.vmem [shape: f32[1,128], index: 4, kind: input, shape index: {}]
  %s5 = inlined_call_operand.hbm [shape: f32[384,128], index: 5, kind: output, shape index: {}]
  %s6 = sld [smem:[#allocation0]]
  $region53: #{tpu_custom_call.1} parent=0
    _
  %s8 = ssub.s32 1, %s6
  %s9 = scalar_select 0, %s8, %s6
  $region1: #{tpu_custom_call.1} parent=0
    #allocation2 [shape = 'u8[196608]{0}', space=vmem, size = 0x30000, scoped, tag = 'output window, operand 0']
    #allocation3 [shape = 's32[2]{0}', space=sflag, size = 0x8, scoped, tag = 'scoped memory for tpu_custom_call.1']
    %10 = vsyncpa [#allocation3], 0
    %s11 = scalar_lea.sflag [#allocation3], 1
    %12 = vsyncpa %s11, 0
    loop: start=0, step=1, limit=4
    $region2: #{tpu_custom_call.1} parent=1 // loop_pre_header
      _
    $region3: #{tpu_custom_call.1} parent=1 // loop_header
      %s14 = sphi 0, %s18
      %p15 = scmp.ge.s32.totalorder %s14, 4
      %s24 = sphi 0, %s26
      %s27 = sphi 0, %s24
      %s28 = sphi 0, %s27
      %s44 = sphi 0, %s28
      %s48 = sphi 0, %s48
      %s50 = sphi 0, %s48
      %s51 = sphi 0, %s50
      %s65 = sphi 0, %s51
      %s69 = sphi 0, %s69
      %s71 = sphi 0, %s69
      %s72 = sphi 0, %s71
      %s86 = sphi 0, %s72
      %s90 = sphi 0, %s90
      %s92 = sphi 0, %s90
      %s93 = sphi 0, %s92
      %s107 = sphi 0, %s93
      %s111 = sphi 0, %s111
      %s113 = sphi 0, %s111
      %s114 = sphi 0, %s113
      %s128 = sphi 0, %s114
      %s134 = sphi 0, %s136
      %s137 = sphi 0, %s134
      %s138 = sphi 0, %s137
      %s154 = sphi 0, %s138
    $region4: #{tpu_custom_call.1} parent=1 // loop_header_branch
      %17 = sbr.rel (%p15) target = $region8
    $region5: #{tpu_custom_call.1} parent=1 // loop_body
      %s19 = ssub.s32 %s14, 1
      %s20 = ssub.s32 %s14, 2
      %s21 = sadd.s32 %s14, 1
      %s22 = ssub.s32 %s14, %s21
      %p23 = scmp.eq.s32.totalorder %s22, 0
      %s25 = sadd.s32 %s24, 1
      %s26 = scalar_select %p23, %s24, %s25
      %p29 = pneg %p23
      %p30 = scmp.eq.s32.totalorder %s14, 1
      %p31 = por %p29, %p30
      %p32 = scmp.ne.s32.totalorder %s24, %s27
      %p33 = scmp.eq.s32.totalorder %s14, 0
      %p34 = por %p32, %p33
      %p35 = scmp.ne.s32.totalorder %s24, %s27
      %p36 = scmp.eq.s32.totalorder %s19, 1
      %p37 = por %p35, %p36
      %p38 = scmp.ne.s32.totalorder %s27, %s28
      %p39 = scmp.eq.s32.totalorder %s19, 0
      %p40 = por %p38, %p39
      %p41 = scmp.ne.s32.totalorder %s27, %s28
      %p42 = scmp.eq.s32.totalorder %s20, 1
      %p43 = por %p41, %p42
      %p45 = scmp.ne.s32.totalorder %s28, %s44
      %p46 = scmp.eq.s32.totalorder %s20, 0
      %p47 = por %p45, %p46
      %s49 = sadd.s32 %s48, 1
      %p52 = scmp.eq.s32.totalorder %s14, 1
      %p53 = scmp.ne.s32.totalorder %s48, %s50
      %p54 = scmp.eq.s32.totalorder %s14, 0
      %p55 = por %p53, %p54
      %p56 = scmp.ne.s32.totalorder %s48, %s50
      %p57 = scmp.eq.s32.totalorder %s19, 1
      %p58 = por %p56, %p57
      %p59 = scmp.ne.s32.totalorder %s50, %s51
      %p60 = scmp.eq.s32.totalorder %s19, 0
      %p61 = por %p59, %p60
      %p62 = scmp.ne.s32.totalorder %s50, %s51
      %p63 = scmp.eq.s32.totalorder %s20, 1
      %p64 = por %p62, %p63
      %p66 = scmp.ne.s32.totalorder %s51, %s65
      %p67 = scmp.eq.s32.totalorder %s20, 0
      %p68 = por %p66, %p67
      %s70 = sadd.s32 %s69, 1
      %p73 = scmp.eq.s32.totalorder %s14, 1
      %p74 = scmp.ne.s32.totalorder %s69, %s71
      %p75 = scmp.eq.s32.totalorder %s14, 0
      %p76 = por %p74, %p75
      %p77 = scmp.ne.s32.totalorder %s69, %s71
      %p78 = scmp.eq.s32.totalorder %s19, 1
      %p79 = por %p77, %p78
      %p80 = scmp.ne.s32.totalorder %s71, %s72
      %p81 = scmp.eq.s32.totalorder %s19, 0
      %p82 = por %p80, %p81
      %p83 = scmp.ne.s32.totalorder %s71, %s72
      %p84 = scmp.eq.s32.totalorder %s20, 1
      %p85 = por %p83, %p84
      %p87 = scmp.ne.s32.totalorder %s72, %s86
      %p88 = scmp.eq.s32.totalorder %s20, 0
      %p89 = por %p87, %p88
      %s91 = sadd.s32 %s90, 1
      %p94 = scmp.eq.s32.totalorder %s14, 1
      %p95 = scmp.ne.s32.totalorder %s90, %s92
      %p96 = scmp.eq.s32.totalorder %s14, 0
      %p97 = por %p95, %p96
      %p98 = scmp.ne.s32.totalorder %s90, %s92
      %p99 = scmp.eq.s32.totalorder %s19, 1
      %p100 = por %p98, %p99
      %p101 = scmp.ne.s32.totalorder %s92, %s93
      %p102 = scmp.eq.s32.totalorder %s19, 0
      %p103 = por %p101, %p102
      %p104 = scmp.ne.s32.totalorder %s92, %s93
      %p105 = scmp.eq.s32.totalorder %s20, 1
      %p106 = por %p104, %p105
      %p108 = scmp.ne.s32.totalorder %s93, %s107
      %p109 = scmp.eq.s32.totalorder %s20, 0
      %p110 = por %p108, %p109
      %s112 = sadd.s32 %s111, 1
      %p115 = scmp.eq.s32.totalorder %s14, 1
      %p116 = scmp.ne.s32.totalorder %s111, %s113
      %p117 = scmp.eq.s32.totalorder %s14, 0
      %p118 = por %p116, %p117
      %p119 = scmp.ne.s32.totalorder %s111, %s113
      %p120 = scmp.eq.s32.totalorder %s19, 1
      %p121 = por %p119, %p120
      %p122 = scmp.ne.s32.totalorder %s113, %s114
      %p123 = scmp.eq.s32.totalorder %s19, 0
      %p124 = por %p122, %p123
      %p125 = scmp.ne.s32.totalorder %s113, %s114
      %p126 = scmp.eq.s32.totalorder %s20, 1
      %p127 = por %p125, %p126
      %p129 = scmp.ne.s32.totalorder %s114, %s128
      %p130 = scmp.eq.s32.totalorder %s20, 0
      %p131 = por %p129, %p130
      %s132 = ssub.s32 %s14, %s21
      %p133 = scmp.eq.s32.totalorder %s132, 0
      %s135 = sadd.s32 %s134, 1
      %s136 = scalar_select %p133, %s134, %s135
      %p139 = pneg %p133
      %p140 = scmp.eq.s32.totalorder %s14, 1
      %p141 = por %p139, %p140
      %p142 = scmp.ne.s32.totalorder %s134, %s137
      %p143 = scmp.eq.s32.totalorder %s14, 0
      %p144 = por %p142, %p143
      %p145 = scmp.ne.s32.totalorder %s134, %s137
      %p146 = scmp.eq.s32.totalorder %s19, 1
      %p147 = por %p145, %p146
      %p148 = scmp.ne.s32.totalorder %s137, %s138
      %p149 = scmp.eq.s32.totalorder %s19, 0
      %p150 = por %p148, %p149
      %p151 = scmp.ne.s32.totalorder %s137, %s138
      %p152 = scmp.eq.s32.totalorder %s20, 1
      %p153 = por %p151, %p152
      %p155 = scmp.ne.s32.totalorder %s138, %s154
      %p156 = scmp.eq.s32.totalorder %s20, 0
      %p157 = por %p155, %p156
      %p158 = scmp.le.s32.totalorder 1, %s14
      %p159 = scmp.lt.s32.totalorder %s14, 3
      %p160 = pnand %p158, %p159
      %p161 = pneg %p160
      // Predicated region
      $region9: #{tpu_custom_call.1} parent=5 // pred_check
        _
      $region10: #{tpu_custom_call.1} parent=5 // pred_check_branch
        %163 = sbr.rel (%p160) target = $region12
      $region11: #{tpu_custom_call.1} parent=5 // pred_region
        %s164 = ssub.s32 %s14, 1
        // Predicated region
        $region13: #{tpu_custom_call.1} parent=11 // pred_check
          %p165 = pneg %p61
        $region14: #{tpu_custom_call.1} parent=11 // pred_check_branch
          %167 = sbr.rel (%p165) target = $region16
        $region15: #{tpu_custom_call.1} parent=11 // pred_region
          _
        $region16: #{tpu_custom_call.1} parent=11 // pred_fallthru
          _
        // Predicated region
        $region17: #{tpu_custom_call.1} parent=11 // pred_check
          %p168 = pneg %p82
        $region18: #{tpu_custom_call.1} parent=11 // pred_check_branch
          %170 = sbr.rel (%p168) target = $region20
        $region19: #{tpu_custom_call.1} parent=11 // pred_region
          _
        $region20: #{tpu_custom_call.1} parent=11 // pred_fallthru
          _
        // Predicated region
        $region21: #{tpu_custom_call.1} parent=11 // pred_check
          %p171 = pneg %p103
        $region22: #{tpu_custom_call.1} parent=11 // pred_check_branch
          %173 = sbr.rel (%p171) target = $region24
        $region23: #{tpu_custom_call.1} parent=11 // pred_region
          _
        $region24: #{tpu_custom_call.1} parent=11 // pred_fallthru
          _
        // Predicated region
        $region25: #{tpu_custom_call.1} parent=11 // pred_check
          %p174 = pneg %p124
        $region26: #{tpu_custom_call.1} parent=11 // pred_check_branch
          %176 = sbr.rel (%p174) target = $region28
        $region27: #{tpu_custom_call.1} parent=11 // pred_region
          _
        $region28: #{tpu_custom_call.1} parent=11 // pred_fallthru
          _
      $region12: #{tpu_custom_call.1} parent=5 // pred_fallthru
        _
      %p177 = scmp.lt.s32.totalorder %s14, 2
      // Predicated region
      $region29: #{tpu_custom_call.1} parent=5 // pred_check
        %p178 = pneg %p177
      $region30: #{tpu_custom_call.1} parent=5 // pred_check_branch
        %180 = sbr.rel (%p178) target = $region32
      $region31: #{tpu_custom_call.1} parent=5 // pred_region
        // Predicated region
        $region33: #{tpu_custom_call.1} parent=31 // pred_check
          %p181 = pneg %p34
        $region34: #{tpu_custom_call.1} parent=31 // pred_check_branch
          %183 = sbr.rel (%p181) target = $region36
        $region35: #{tpu_custom_call.1} parent=31 // pred_region
          %s184 = smul.u32 24, %s14
          %p185 = scmp.lt.s32.totalorder %s184, 47
          %s186 = scalar_select %p185, %s184, 47
          %s187 = smul.addr %s186, 7
          %s188 = smul.addr %s187, 8
          %s189 = scalar_lea.vmem %s0, %s188
          %s190 = smul.u32 24, %s14
        $region36: #{tpu_custom_call.1} parent=31 // pred_fallthru
          _
      $region32: #{tpu_custom_call.1} parent=5 // pred_fallthru
        _
      %p191 = scmp.le.s32.totalorder 1, %s14
      %p192 = scmp.lt.s32.totalorder %s14, 3
      %p193 = pnand %p191, %p192
      %p194 = pneg %p193
      // Predicated region
      $region37: #{tpu_custom_call.1} parent=5 // pred_check
        _
      $region38: #{tpu_custom_call.1} parent=5 // pred_check_branch
        %196 = sbr.rel (%p193) target = $region40
      $region39: #{tpu_custom_call.1} parent=5 // pred_region
        %s197 = ssub.s32 %s14, 1
        %s198 = smul.u32 24, %s19
        %p199 = scmp.lt.s32.totalorder %s198, 47
        %s200 = scalar_select %p199, %s198, 47
        %s201 = smul.addr %s200, 7
        %s202 = smul.addr %s201, 8
        %s203 = scalar_lea.vmem %s0, %s202
        %p204 = pneg %p40
        %p205 = pneg %p37
        %p206 = pneg %p61
        %p207 = pneg %p58
        %p208 = pneg %p82
        %p209 = pneg %p79
        %p210 = pneg %p103
        %p211 = pneg %p100
        %p212 = pneg %p124
        %p213 = pneg %p121
        %p214 = pneg %p150
        %p215 = pneg %p147
        %s216 = sand.u32 %s137, 1
        %s217 = scalar_lea.sflag [#allocation3], %s216
        %s218 = sand.u32 %s137, 1
        %s219 = smul.addr %s218, 192
        %s220 = scalar_lea.vmem [#allocation2], %s219
        %s221 = smul.u32 24, %s19
        %p222 = scmp.lt.s32.totalorder %s221, 47
        %s223 = scalar_select %p222, %s221, 47
        %s224 = smul.addr %s223, 7
        %s225 = smul.addr %s224, 8
        %s226 = scalar_lea.vmem %s0, %s225
        %s227 = smul.u32 24, %s19
        %s228 = smul.u32 24, %s19
        %v230 = vld [vmem:[%s226] sm:$0xff]
        %v231 = vld [vmem:[%s226 + $0x8] sm:$0xff]
        %v232 = vld [vmem:[%s226 + $0x10] sm:$0xff]
        %v233 = vld [vmem:[%s226 + $0x18] sm:$0xff]
        %v234 = vld [vmem:[%s226 + $0x20] sm:$0xff]
        %v235 = vld [vmem:[%s226 + $0x28] sm:$0xff]
        %v236 = vld [vmem:[%s226 + $0x30] sm:$0xff]
        %v237 = vld [vmem:[%s226 + $0x38] sm:$0xff]
        %v238 = vld [vmem:[%s226 + $0x40] sm:$0xff]
        %v239 = vld [vmem:[%s226 + $0x48] sm:$0xff]
        %v240 = vld [vmem:[%s226 + $0x50] sm:$0xff]
        %v241 = vld [vmem:[%s226 + $0x58] sm:$0xff]
        %v242 = vld [vmem:[%s226 + $0x60] sm:$0xff]
        %v243 = vld [vmem:[%s226 + $0x68] sm:$0xff]
        %v244 = vld [vmem:[%s226 + $0x70] sm:$0xff]
        %v245 = vld [vmem:[%s226 + $0x78] sm:$0xff]
        %v246 = vld [vmem:[%s226 + $0x80] sm:$0xff]
        %v247 = vld [vmem:[%s226 + $0x88] sm:$0xff]
        %v248 = vld [vmem:[%s226 + $0x90] sm:$0xff]
        %v249 = vld [vmem:[%s226 + $0x98] sm:$0xff]
        %v250 = vld [vmem:[%s226 + $0xa0] sm:$0xff]
        %v251 = vld [vmem:[%s226 + $0xa8] sm:$0xff]
        %v252 = vld [vmem:[%s226 + $0xb0] sm:$0xff]
        %v253 = vld [vmem:[%s226 + $0xb8] sm:$0xff]
        %v254 = vld [vmem:[%s226 + $0xc0] sm:$0xff]
        %v255 = vld [vmem:[%s226 + $0xc8] sm:$0xff]
        %v256 = vld [vmem:[%s226 + $0xd0] sm:$0xff]
        %v257 = vld [vmem:[%s226 + $0xd8] sm:$0xff]
        %v258 = vld [vmem:[%s226 + $0xe0] sm:$0xff]
        %v259 = vld [vmem:[%s226 + $0xe8] sm:$0xff]
        %v260 = vld [vmem:[%s226 + $0xf0] sm:$0xff]
        %v261 = vld [vmem:[%s226 + $0xf8] sm:$0xff]
        %v262 = vld [vmem:[%s226 + $0x100] sm:$0xff]
        %v263 = vld [vmem:[%s226 + $0x108] sm:$0xff]
        %v264 = vld [vmem:[%s226 + $0x110] sm:$0xff]
        %v265 = vld [vmem:[%s226 + $0x118] sm:$0xff]
        %v266 = vld [vmem:[%s226 + $0x120] sm:$0xff]
        %v267 = vld [vmem:[%s226 + $0x128] sm:$0xff]
        %v268 = vld [vmem:[%s226 + $0x130] sm:$0xff]
        %v269 = vld [vmem:[%s226 + $0x138] sm:$0xff]
        %v270 = vld [vmem:[%s226 + $0x140] sm:$0xff]
        %v271 = vld [vmem:[%s226 + $0x148] sm:$0xff]
        %v272 = vld [vmem:[%s226 + $0x150] sm:$0xff]
        %v273 = vld [vmem:[%s226 + $0x158] sm:$0xff]
        %v274 = vld [vmem:[%s226 + $0x160] sm:$0xff]
        %v275 = vld [vmem:[%s226 + $0x168] sm:$0xff]
        %v276 = vld [vmem:[%s226 + $0x170] sm:$0xff]
        %v277 = vld [vmem:[%s226 + $0x178] sm:$0xff]
        %v278 = vld [vmem:[%s226 + $0x180] sm:$0xff]
        %v279 = vld [vmem:[%s226 + $0x188] sm:$0xff]
        %v280 = vld [vmem:[%s226 + $0x190] sm:$0xff]
        %v281 = vld [vmem:[%s226 + $0x198] sm:$0xff]
        %v282 = vld [vmem:[%s226 + $0x1a0] sm:$0xff]
        %v283 = vld [vmem:[%s226 + $0x1a8] sm:$0xff]
        %v284 = vld [vmem:[%s226 + $0x1b0] sm:$0xff]
        %v285 = vld [vmem:[%s226 + $0x1b8] sm:$0xff]
        %v286 = vld [vmem:[%s226 + $0x1c0] sm:$0xff]
        %v287 = vld [vmem:[%s226 + $0x1c8] sm:$0xff]
        %v288 = vld [vmem:[%s226 + $0x1d0] sm:$0xff]
        %v289 = vld [vmem:[%s226 + $0x1d8] sm:$0xff]
        %v290 = vld [vmem:[%s226 + $0x1e0] sm:$0xff]
        %v291 = vld [vmem:[%s226 + $0x1e8] sm:$0xff]
        %v292 = vld [vmem:[%s226 + $0x1f0] sm:$0xff]
        %v293 = vld [vmem:[%s226 + $0x1f8] sm:$0xff]
        %v294 = vld [vmem:[%s226 + $0x200] sm:$0xff]
        %v295 = vld [vmem:[%s226 + $0x208] sm:$0xff]
        %v296 = vld [vmem:[%s226 + $0x210] sm:$0xff]
        %v297 = vld [vmem:[%s226 + $0x218] sm:$0xff]
        %v298 = vld [vmem:[%s226 + $0x220] sm:$0xff]
        %v299 = vld [vmem:[%s226 + $0x228] sm:$0xff]
        %v300 = vld [vmem:[%s226 + $0x230] sm:$0xff]
        %v301 = vld [vmem:[%s226 + $0x238] sm:$0xff]
        %v302 = vld [vmem:[%s226 + $0x240] sm:$0xff]
        %v303 = vld [vmem:[%s226 + $0x248] sm:$0xff]
        %v304 = vld [vmem:[%s226 + $0x250] sm:$0xff]
        %v305 = vld [vmem:[%s226 + $0x258] sm:$0xff]
        %v306 = vld [vmem:[%s226 + $0x260] sm:$0xff]
        %v307 = vld [vmem:[%s226 + $0x268] sm:$0xff]
        %v308 = vld [vmem:[%s226 + $0x270] sm:$0xff]
        %v309 = vld [vmem:[%s226 + $0x278] sm:$0xff]
        %v310 = vld [vmem:[%s226 + $0x280] sm:$0xff]
        %v311 = vld [vmem:[%s226 + $0x288] sm:$0xff]
        %v312 = vld [vmem:[%s226 + $0x290] sm:$0xff]
        %v313 = vld [vmem:[%s226 + $0x298] sm:$0xff]
        %v314 = vld [vmem:[%s226 + $0x2a0] sm:$0xff]
        %v315 = vld [vmem:[%s226 + $0x2a8] sm:$0xff]
        %v316 = vld [vmem:[%s226 + $0x2b0] sm:$0xff]
        %v317 = vld [vmem:[%s226 + $0x2b8] sm:$0xff]
        %v318 = vld [vmem:[%s226 + $0x2c0] sm:$0xff]
        %v319 = vld [vmem:[%s226 + $0x2c8] sm:$0xff]
        %v320 = vld [vmem:[%s226 + $0x2d0] sm:$0xff]
        %v321 = vld [vmem:[%s226 + $0x2d8] sm:$0xff]
        %v322 = vld [vmem:[%s226 + $0x2e0] sm:$0xff]
        %v323 = vld [vmem:[%s226 + $0x2e8] sm:$0xff]
        %v324 = vld [vmem:[%s226 + $0x2f0] sm:$0xff]
        %v325 = vld [vmem:[%s226 + $0x2f8] sm:$0xff]
        %v326 = vld [vmem:[%s226 + $0x300] sm:$0xff]
        %v327 = vld [vmem:[%s226 + $0x308] sm:$0xff]
        %v328 = vld [vmem:[%s226 + $0x310] sm:$0xff]
        %v329 = vld [vmem:[%s226 + $0x318] sm:$0xff]
        %v330 = vld [vmem:[%s226 + $0x320] sm:$0xff]
        %v331 = vld [vmem:[%s226 + $0x328] sm:$0xff]
        %v332 = vld [vmem:[%s226 + $0x330] sm:$0xff]
        %v333 = vld [vmem:[%s226 + $0x338] sm:$0xff]
        %v334 = vld [vmem:[%s226 + $0x340] sm:$0xff]
        %v335 = vld [vmem:[%s226 + $0x348] sm:$0xff]
        %v336 = vld [vmem:[%s226 + $0x350] sm:$0xff]
        %v337 = vld [vmem:[%s226 + $0x358] sm:$0xff]
        %v338 = vld [vmem:[%s226 + $0x360] sm:$0xff]
        %v339 = vld [vmem:[%s226 + $0x368] sm:$0xff]
        %v340 = vld [vmem:[%s226 + $0x370] sm:$0xff]
        %v341 = vld [vmem:[%s226 + $0x378] sm:$0xff]
        %v342 = vld [vmem:[%s226 + $0x380] sm:$0xff]
        %v343 = vld [vmem:[%s226 + $0x388] sm:$0xff]
        %v344 = vld [vmem:[%s226 + $0x390] sm:$0xff]
        %v345 = vld [vmem:[%s226 + $0x398] sm:$0xff]
        %v346 = vld [vmem:[%s226 + $0x3a0] sm:$0xff]
        %v347 = vld [vmem:[%s226 + $0x3a8] sm:$0xff]
        %v348 = vld [vmem:[%s226 + $0x3b0] sm:$0xff]
        %v349 = vld [vmem:[%s226 + $0x3b8] sm:$0xff]
        %v350 = vld [vmem:[%s226 + $0x3c0] sm:$0xff]
        %v351 = vld [vmem:[%s226 + $0x3c8] sm:$0xff]
        %v352 = vld [vmem:[%s226 + $0x3d0] sm:$0xff]
        %v353 = vld [vmem:[%s226 + $0x3d8] sm:$0xff]
        %v354 = vld [vmem:[%s226 + $0x3e0] sm:$0xff]
        %v355 = vld [vmem:[%s226 + $0x3e8] sm:$0xff]
        %v356 = vld [vmem:[%s226 + $0x3f0] sm:$0xff]
        %v357 = vld [vmem:[%s226 + $0x3f8] sm:$0xff]
        %v358 = vld [vmem:[%s226 + $0x400] sm:$0xff]
        %v359 = vld [vmem:[%s226 + $0x408] sm:$0xff]
        %v360 = vld [vmem:[%s226 + $0x410] sm:$0xff]
        %v361 = vld [vmem:[%s226 + $0x418] sm:$0xff]
        %v362 = vld [vmem:[%s226 + $0x420] sm:$0xff]
        %v363 = vld [vmem:[%s226 + $0x428] sm:$0xff]
        %v364 = vld [vmem:[%s226 + $0x430] sm:$0xff]
        %v365 = vld [vmem:[%s226 + $0x438] sm:$0xff]
        %v366 = vld [vmem:[%s226 + $0x440] sm:$0xff]
        %v367 = vld [vmem:[%s226 + $0x448] sm:$0xff]
        %v368 = vld [vmem:[%s226 + $0x450] sm:$0xff]
        %v369 = vld [vmem:[%s226 + $0x458] sm:$0xff]
        %v370 = vld [vmem:[%s226 + $0x460] sm:$0xff]
        %v371 = vld [vmem:[%s226 + $0x468] sm:$0xff]
        %v372 = vld [vmem:[%s226 + $0x470] sm:$0xff]
        %v373 = vld [vmem:[%s226 + $0x478] sm:$0xff]
        %v374 = vld [vmem:[%s226 + $0x480] sm:$0xff]
        %v375 = vld [vmem:[%s226 + $0x488] sm:$0xff]
        %v376 = vld [vmem:[%s226 + $0x490] sm:$0xff]
        %v377 = vld [vmem:[%s226 + $0x498] sm:$0xff]
        %v378 = vld [vmem:[%s226 + $0x4a0] sm:$0xff]
        %v379 = vld [vmem:[%s226 + $0x4a8] sm:$0xff]
        %v380 = vld [vmem:[%s226 + $0x4b0] sm:$0xff]
        %v381 = vld [vmem:[%s226 + $0x4b8] sm:$0xff]
        %v382 = vld [vmem:[%s226 + $0x4c0] sm:$0xff]
        %v383 = vld [vmem:[%s226 + $0x4c8] sm:$0xff]
        %v384 = vld [vmem:[%s226 + $0x4d0] sm:$0xff]
        %v385 = vld [vmem:[%s226 + $0x4d8] sm:$0xff]
        %v386 = vld [vmem:[%s226 + $0x4e0] sm:$0xff]
        %v387 = vld [vmem:[%s226 + $0x4e8] sm:$0xff]
        %v388 = vld [vmem:[%s226 + $0x4f0] sm:$0xff]
        %v389 = vld [vmem:[%s226 + $0x4f8] sm:$0xff]
        %v390 = vld [vmem:[%s226 + $0x500] sm:$0xff]
        %v391 = vld [vmem:[%s226 + $0x508] sm:$0xff]
        %v392 = vld [vmem:[%s226 + $0x510] sm:$0xff]
        %v393 = vld [vmem:[%s226 + $0x518] sm:$0xff]
        %v394 = vld [vmem:[%s226 + $0x520] sm:$0xff]
        %v395 = vld [vmem:[%s226 + $0x528] sm:$0xff]
        %v396 = vld [vmem:[%s226 + $0x530] sm:$0xff]
        %v397 = vld [vmem:[%s226 + $0x538] sm:$0xff]
        %v398 = vpack.c.bf16 %v237, %v230
        %v399 = vpack.c.bf16 %v238, %v231
        %v400 = vpack.c.bf16 %v239, %v232
        %v401 = vpack.c.bf16 %v240, %v233
        %v402 = vpack.c.bf16 %v241, %v234
        %v403 = vpack.c.bf16 %v242, %v235
        %v404 = vpack.c.bf16 %v243, %v236
        %v405 = vpack.c.bf16 %v251, %v244
        %v406 = vpack.c.bf16 %v252, %v245
        %v407 = vpack.c.bf16 %v253, %v246
        %v408 = vpack.c.bf16 %v254, %v247
        %v409 = vpack.c.bf16 %v255, %v248
        %v410 = vpack.c.bf16 %v256, %v249
        %v411 = vpack.c.bf16 %v257, %v250
        %v412 = vpack.c.bf16 %v265, %v258
        %v413 = vpack.c.bf16 %v266, %v259
        %v414 = vpack.c.bf16 %v267, %v260
        %v415 = vpack.c.bf16 %v268, %v261
        %v416 = vpack.c.bf16 %v269, %v262
        %v417 = vpack.c.bf16 %v270, %v263
        %v418 = vpack.c.bf16 %v271, %v264
        %v419 = vpack.c.bf16 %v279, %v272
        %v420 = vpack.c.bf16 %v280, %v273
        %v421 = vpack.c.bf16 %v281, %v274
        %v422 = vpack.c.bf16 %v282, %v275
        %v423 = vpack.c.bf16 %v283, %v276
        %v424 = vpack.c.bf16 %v284, %v277
        %v425 = vpack.c.bf16 %v285, %v278
        %v426 = vpack.c.bf16 %v293, %v286
        %v427 = vpack.c.bf16 %v294, %v287
        %v428 = vpack.c.bf16 %v295, %v288
        %v429 = vpack.c.bf16 %v296, %v289
        %v430 = vpack.c.bf16 %v297, %v290
        %v431 = vpack.c.bf16 %v298, %v291
        %v432 = vpack.c.bf16 %v299, %v292
        %v433 = vpack.c.bf16 %v307, %v300
        %v434 = vpack.c.bf16 %v308, %v301
        %v435 = vpack.c.bf16 %v309, %v302
        %v436 = vpack.c.bf16 %v310, %v303
        %v437 = vpack.c.bf16 %v311, %v304
        %v438 = vpack.c.bf16 %v312, %v305
        %v439 = vpack.c.bf16 %v313, %v306
        %v440 = vpack.c.bf16 %v321, %v314
        %v441 = vpack.c.bf16 %v322, %v315
        %v442 = vpack.c.bf16 %v323, %v316
        %v443 = vpack.c.bf16 %v324, %v317
        %v444 = vpack.c.bf16 %v325, %v318
        %v445 = vpack.c.bf16 %v326, %v319
        %v446 = vpack.c.bf16 %v327, %v320
        %v447 = vpack.c.bf16 %v335, %v328
        %v448 = vpack.c.bf16 %v336, %v329
        %v449 = vpack.c.bf16 %v337, %v330
        %v450 = vpack.c.bf16 %v338, %v331
        %v451 = vpack.c.bf16 %v339, %v332
        %v452 = vpack.c.bf16 %v340, %v333
        %v453 = vpack.c.bf16 %v341, %v334
        %v454 = vpack.c.bf16 %v349, %v342
        %v455 = vpack.c.bf16 %v350, %v343
        %v456 = vpack.c.bf16 %v351, %v344
        %v457 = vpack.c.bf16 %v352, %v345
        %v458 = vpack.c.bf16 %v353, %v346
        %v459 = vpack.c.bf16 %v354, %v347
        %v460 = vpack.c.bf16 %v355, %v348
        %v461 = vpack.c.bf16 %v363, %v356
        %v462 = vpack.c.bf16 %v364, %v357
        %v463 = vpack.c.bf16 %v365, %v358
        %v464 = vpack.c.bf16 %v366, %v359
        %v465 = vpack.c.bf16 %v367, %v360
        %v466 = vpack.c.bf16 %v368, %v361
        %v467 = vpack.c.bf16 %v369, %v362
        %v468 = vpack.c.bf16 %v377, %v370
        %v469 = vpack.c.bf16 %v378, %v371
        %v470 = vpack.c.bf16 %v379, %v372
        %v471 = vpack.c.bf16 %v380, %v373
        %v472 = vpack.c.bf16 %v381, %v374
        %v473 = vpack.c.bf16 %v382, %v375
        %v474 = vpack.c.bf16 %v383, %v376
        %v475 = vpack.c.bf16 %v391, %v384
        %v476 = vpack.c.bf16 %v392, %v385
        %v477 = vpack.c.bf16 %v393, %v386
        %v478 = vpack.c.bf16 %v394, %v387
        %v479 = vpack.c.bf16 %v395, %v388
        %v480 = vpack.c.bf16 %v396, %v389
        %v481 = vpack.c.bf16 %v397, %v390
        %v482 = vld [vmem:[%s1] sm:$0xf]
        %v483 = vld [vmem:[%s1 + $0x4] sm:$0xf]
        %v484 = vld [vmem:[%s1 + $0x8] sm:$0xf]
        %v485 = vld [vmem:[%s1 + $0xc] sm:$0xf]
        %v486 = vld [vmem:[%s1 + $0x10] sm:$0xf]
        %v487 = vld [vmem:[%s1 + $0x14] sm:$0xf]
        %v488 = vld [vmem:[%s1 + $0x18] sm:$0xf]
        %v489 = vld [vmem:[%s1 + $0x1c] sm:$0xf]
        %v490 = vld [vmem:[%s1 + $0x20] sm:$0xf]
        %v491 = vld [vmem:[%s1 + $0x24] sm:$0xf]
        %v492 = vld [vmem:[%s1 + $0x28] sm:$0xf]
        %v493 = vld [vmem:[%s1 + $0x2c] sm:$0xf]
        %v494 = vld [vmem:[%s1 + $0x30] sm:$0xf]
        %v495 = vld [vmem:[%s1 + $0x34] sm:$0xf]
        %v496 = vld [vmem:[%s1 + $0x38] sm:$0xf]
        %v497 = vld [vmem:[%s1 + $0x3c] sm:$0xf]
        %v498 = vld [vmem:[%s1 + $0x40] sm:$0xf]
        %v499 = vld [vmem:[%s1 + $0x44] sm:$0xf]
        %v500 = vld [vmem:[%s1 + $0x48] sm:$0xf]
        %v501 = vld [vmem:[%s1 + $0x4c] sm:$0xf]
        %v502 = vld [vmem:[%s1 + $0x50] sm:$0xf]
        %v503 = vld [vmem:[%s1 + $0x54] sm:$0xf]
        %v504 = vld [vmem:[%s1 + $0x58] sm:$0xf]
        %v505 = vld [vmem:[%s1 + $0x5c] sm:$0xf]
        %v506 = vld [vmem:[%s1 + $0x60] sm:$0xf]
        %v507 = vld [vmem:[%s1 + $0x64] sm:$0xf]
        %v508 = vld [vmem:[%s1 + $0x68] sm:$0xf]
        %v509 = vld [vmem:[%s1 + $0x6c] sm:$0xf]
        %v510 = vld [vmem:[%s1 + $0x70] sm:$0xf]
        %v511 = vld [vmem:[%s1 + $0x74] sm:$0xf]
        %v512 = vld [vmem:[%s1 + $0x78] sm:$0xf]
        %v513 = vld [vmem:[%s1 + $0x7c] sm:$0xf]
        %v514 = vld [vmem:[%s1 + $0x80] sm:$0xf]
        %v515 = vld [vmem:[%s1 + $0x84] sm:$0xf]
        %v516 = vld [vmem:[%s1 + $0x88] sm:$0xf]
        %v517 = vld [vmem:[%s1 + $0x8c] sm:$0xf]
        %v518 = vld [vmem:[%s1 + $0x90] sm:$0xf]
        %v519 = vld [vmem:[%s1 + $0x94] sm:$0xf]
        %v520 = vld [vmem:[%s1 + $0x98] sm:$0xf]
        %v521 = vld [vmem:[%s1 + $0x9c] sm:$0xf]
        %v522 = vld [vmem:[%s1 + $0xa0] sm:$0xf]
        %v523 = vld [vmem:[%s1 + $0xa4] sm:$0xf]
        %v524 = vld [vmem:[%s1 + $0xa8] sm:$0xf]
        %v525 = vld [vmem:[%s1 + $0xac] sm:$0xf]
        %v526 = vld [vmem:[%s1 + $0xb0] sm:$0xf]
        %v527 = vld [vmem:[%s1 + $0xb4] sm:$0xf]
        %v528 = vld [vmem:[%s1 + $0xb8] sm:$0xf]
        %v529 = vld [vmem:[%s1 + $0xbc] sm:$0xf]
        %v530 = vld [vmem:[%s1 + $0xc0] sm:$0xf]
        %v531 = vld [vmem:[%s1 + $0xc4] sm:$0xf]
        %v532 = vld [vmem:[%s1 + $0xc8] sm:$0xf]
        %v533 = vld [vmem:[%s1 + $0xcc] sm:$0xf]
        %v534 = vld [vmem:[%s1 + $0xd0] sm:$0xf]
        %v535 = vld [vmem:[%s1 + $0xd4] sm:$0xf]
        %v536 = vld [vmem:[%s1 + $0xd8] sm:$0xf]
        %v537 = vld [vmem:[%s1 + $0xdc] sm:$0xf]
        %v538 = vld [vmem:[%s1 + $0xe0] sm:$0xf]
        %v539 = vld [vmem:[%s1 + $0xe4] sm:$0xf]
        %v540 = vld [vmem:[%s1 + $0xe8] sm:$0xf]
        %v541 = vld [vmem:[%s1 + $0xec] sm:$0xf]
        %v542 = vld [vmem:[%s1 + $0xf0] sm:$0xf]
        %v543 = vld [vmem:[%s1 + $0xf4] sm:$0xf]
        %v544 = vld [vmem:[%s1 + $0xf8] sm:$0xf]
        %v545 = vld [vmem:[%s1 + $0xfc] sm:$0xf]
        %v546 = vld [vmem:[%s1 + $0x100] sm:$0xf]
        %v547 = vld [vmem:[%s1 + $0x104] sm:$0xf]
        %v548 = vld [vmem:[%s1 + $0x108] sm:$0xf]
        %v549 = vld [vmem:[%s1 + $0x10c] sm:$0xf]
        %v550 = vld [vmem:[%s1 + $0x110] sm:$0xf]
        %v551 = vld [vmem:[%s1 + $0x114] sm:$0xf]
        %v552 = vld [vmem:[%s1 + $0x118] sm:$0xf]
        %v553 = vld [vmem:[%s1 + $0x11c] sm:$0xf]
        %v554 = vld [vmem:[%s1 + $0x120] sm:$0xf]
        %v555 = vld [vmem:[%s1 + $0x124] sm:$0xf]
        %v556 = vld [vmem:[%s1 + $0x128] sm:$0xf]
        %v557 = vld [vmem:[%s1 + $0x12c] sm:$0xf]
        %v558 = vld [vmem:[%s1 + $0x130] sm:$0xf]
        %v559 = vld [vmem:[%s1 + $0x134] sm:$0xf]
        %v560 = vld [vmem:[%s1 + $0x138] sm:$0xf]
        %v561 = vld [vmem:[%s1 + $0x13c] sm:$0xf]
        %v562 = vld [vmem:[%s1 + $0x140] sm:$0xf]
        %v563 = vld [vmem:[%s1 + $0x144] sm:$0xf]
        %v564 = vld [vmem:[%s1 + $0x148] sm:$0xf]
        %v565 = vld [vmem:[%s1 + $0x14c] sm:$0xf]
        %v566 = vld [vmem:[%s1 + $0x150] sm:$0xf]
        %v567 = vld [vmem:[%s1 + $0x154] sm:$0xf]
        %v568 = vld [vmem:[%s1 + $0x158] sm:$0xf]
        %v569 = vld [vmem:[%s1 + $0x15c] sm:$0xf]
        %v570 = vld [vmem:[%s1 + $0x160] sm:$0xf]
        %v571 = vld [vmem:[%s1 + $0x164] sm:$0xf]
        %v572 = vld [vmem:[%s1 + $0x168] sm:$0xf]
        %v573 = vld [vmem:[%s1 + $0x16c] sm:$0xf]
        %v574 = vld [vmem:[%s1 + $0x170] sm:$0xf]
        %v575 = vld [vmem:[%s1 + $0x174] sm:$0xf]
        %v576 = vld [vmem:[%s1 + $0x178] sm:$0xf]
        %v577 = vld [vmem:[%s1 + $0x17c] sm:$0xf]
        %v578 = vld [vmem:[%s1 + $0x180] sm:$0xf]
        %v579 = vld [vmem:[%s1 + $0x184] sm:$0xf]
        %v580 = vld [vmem:[%s2] sm:$0x1]
        %v582 = vlaneseq
        %v583 = vshrl.u32 %v582, 7
        %v584 = vsub.s32 0, %v583
        %v585 = vrot.slane %v580, %v584
        %v685 = vunpack.c.l.b16 %v482
        %v686 = vunpack.c.l.b16 %v483
        %v687 = vunpack.c.l.b16 %v484
        %v688 = vunpack.c.l.b16 %v485
        %v689 = vunpack.c.l.b16 %v486
        %v690 = vunpack.c.l.b16 %v487
        %v691 = vunpack.c.l.b16 %v488
        %v692 = vunpack.c.l.b16 %v489
        %v693 = vunpack.c.l.b16 %v490
        %v694 = vunpack.c.l.b16 %v491
        %v695 = vunpack.c.l.b16 %v492
        %v696 = vunpack.c.l.b16 %v493
        %v697 = vunpack.c.l.b16 %v494
        %v698 = vunpack.c.l.b16 %v495
        %v699 = vunpack.c.l.b16 %v496
        %v700 = vunpack.c.l.b16 %v497
        %v701 = vunpack.c.l.b16 %v498
        %v702 = vunpack.c.l.b16 %v499
        %v703 = vunpack.c.l.b16 %v500
        %v704 = vunpack.c.l.b16 %v501
        %v705 = vunpack.c.l.b16 %v502
        %v706 = vunpack.c.l.b16 %v503
        %v707 = vunpack.c.l.b16 %v504
        %v708 = vunpack.c.l.b16 %v505
        %v709 = vunpack.c.l.b16 %v506
        %v710 = vunpack.c.l.b16 %v507
        %v711 = vunpack.c.l.b16 %v508
        %v712 = vunpack.c.l.b16 %v509
        %v713 = vunpack.c.l.b16 %v510
        %v714 = vunpack.c.l.b16 %v511
        %v715 = vunpack.c.l.b16 %v512
        %v716 = vunpack.c.l.b16 %v513
        %v717 = vunpack.c.l.b16 %v514
        %v718 = vunpack.c.l.b16 %v515
        %v719 = vunpack.c.l.b16 %v516
        %v720 = vunpack.c.l.b16 %v517
        %v721 = vunpack.c.l.b16 %v518
        %v722 = vunpack.c.l.b16 %v519
        %v723 = vunpack.c.l.b16 %v520
        %v724 = vunpack.c.l.b16 %v521
        %v725 = vunpack.c.l.b16 %v522
        %v726 = vunpack.c.l.b16 %v523
        %v727 = vunpack.c.l.b16 %v524
        %v728 = vunpack.c.l.b16 %v525
        %v729 = vunpack.c.l.b16 %v526
        %v730 = vunpack.c.l.b16 %v527
        %v731 = vunpack.c.l.b16 %v528
        %v732 = vunpack.c.l.b16 %v529
        %v733 = vunpack.c.l.b16 %v530
        %v734 = vunpack.c.l.b16 %v531
        %v735 = vunpack.c.l.b16 %v532
        %v736 = vunpack.c.l.b16 %v533
        %v737 = vunpack.c.l.b16 %v534
        %v738 = vunpack.c.l.b16 %v535
        %v739 = vunpack.c.l.b16 %v536
        %v740 = vunpack.c.l.b16 %v537
        %v741 = vunpack.c.l.b16 %v538
        %v742 = vunpack.c.l.b16 %v539
        %v743 = vunpack.c.l.b16 %v540
        %v744 = vunpack.c.l.b16 %v541
        %v745 = vunpack.c.l.b16 %v542
        %v746 = vunpack.c.l.b16 %v543
        %v747 = vunpack.c.l.b16 %v544
        %v748 = vunpack.c.l.b16 %v545
        %v749 = vunpack.c.l.b16 %v546
        %v750 = vunpack.c.l.b16 %v547
        %v751 = vunpack.c.l.b16 %v548
        %v752 = vunpack.c.l.b16 %v549
        %v753 = vunpack.c.l.b16 %v550
        %v754 = vunpack.c.l.b16 %v551
        %v755 = vunpack.c.l.b16 %v552
        %v756 = vunpack.c.l.b16 %v553
        %v757 = vunpack.c.l.b16 %v554
        %v758 = vunpack.c.l.b16 %v555
        %v759 = vunpack.c.l.b16 %v556
        %v760 = vunpack.c.l.b16 %v557
        %v761 = vunpack.c.l.b16 %v558
        %v762 = vunpack.c.l.b16 %v559
        %v763 = vunpack.c.l.b16 %v560
        %v764 = vunpack.c.l.b16 %v561
        %v765 = vunpack.c.l.b16 %v562
        %v766 = vunpack.c.l.b16 %v563
        %v767 = vunpack.c.l.b16 %v564
        %v768 = vunpack.c.l.b16 %v565
        %v769 = vunpack.c.l.b16 %v566
        %v770 = vunpack.c.l.b16 %v567
        %v771 = vunpack.c.l.b16 %v568
        %v772 = vunpack.c.l.b16 %v569
        %v773 = vunpack.c.l.b16 %v570
        %v774 = vunpack.c.l.b16 %v571
        %v775 = vunpack.c.l.b16 %v572
        %v776 = vunpack.c.l.b16 %v573
        %v777 = vunpack.c.l.b16 %v574
        %v778 = vunpack.c.l.b16 %v575
        %v779 = vunpack.c.l.b16 %v576
        %v780 = vunpack.c.l.b16 %v577
        %v781 = vunpack.c.l.b16 %v578
        %v782 = vunpack.c.l.b16 %v579
        %v783 = vpack.c.b16 %v686, %v685
        %v784 = vpack.c.b16 %v688, %v687
        %v785 = vpack.c.b16 %v690, %v689
        %v786 = vpack.c.b16 %v692, %v691
        %v787 = vpack.c.b16 %v694, %v693
        %v788 = vpack.c.b16 %v696, %v695
        %v789 = vpack.c.b16 %v698, %v697
        %v790 = vpack.c.b16 %v700, %v699
        %v791 = vpack.c.b16 %v702, %v701
        %v792 = vpack.c.b16 %v704, %v703
        %v793 = vpack.c.b16 %v706, %v705
        %v794 = vpack.c.b16 %v708, %v707
        %v795 = vpack.c.b16 %v710, %v709
        %v796 = vpack.c.b16 %v712, %v711
        %v797 = vpack.c.b16 %v714, %v713
        %v798 = vpack.c.b16 %v716, %v715
        %v799 = vpack.c.b16 %v718, %v717
        %v800 = vpack.c.b16 %v720, %v719
        %v801 = vpack.c.b16 %v722, %v721
        %v802 = vpack.c.b16 %v724, %v723
        %v803 = vpack.c.b16 %v726, %v725
        %v804 = vpack.c.b16 %v728, %v727
        %v805 = vpack.c.b16 %v730, %v729
        %v806 = vpack.c.b16 %v732, %v731
        %v807 = vpack.c.b16 %v734, %v733
        %v808 = vpack.c.b16 %v736, %v735
        %v809 = vpack.c.b16 %v738, %v737
        %v810 = vpack.c.b16 %v740, %v739
        %v811 = vpack.c.b16 %v742, %v741
        %v812 = vpack.c.b16 %v744, %v743
        %v813 = vpack.c.b16 %v746, %v745
        %v814 = vpack.c.b16 %v748, %v747
        %v815 = vpack.c.b16 %v750, %v749
        %v816 = vpack.c.b16 %v752, %v751
        %v817 = vpack.c.b16 %v754, %v753
        %v818 = vpack.c.b16 %v756, %v755
        %v819 = vpack.c.b16 %v758, %v757
        %v820 = vpack.c.b16 %v760, %v759
        %v821 = vpack.c.b16 %v762, %v761
        %v822 = vpack.c.b16 %v764, %v763
        %v823 = vpack.c.b16 %v766, %v765
        %v824 = vpack.c.b16 %v768, %v767
        %v825 = vpack.c.b16 %v770, %v769
        %v826 = vpack.c.b16 %v772, %v771
        %v827 = vpack.c.b16 %v774, %v773
        %v828 = vpack.c.b16 %v776, %v775
        %v829 = vpack.c.b16 %v778, %v777
        %v830 = vpack.c.b16 %v780, %v779
        %v831 = vpack.c.b16 %v782, %v781
        %vm881 = vcmask 130048
        %v883 = vsel %vm881, %v404, 0
        %v886 = vsel %vm881, %v411, 0
        %v889 = vsel %vm881, %v418, 0
        %v892 = vsel %vm881, %v425, 0
        %v895 = vsel %vm881, %v432, 0
        %v898 = vsel %vm881, %v439, 0
        %v901 = vsel %vm881, %v446, 0
        %v904 = vsel %vm881, %v453, 0
        %v907 = vsel %vm881, %v460, 0
        %v910 = vsel %vm881, %v467, 0
        %v913 = vsel %vm881, %v474, 0
        %v916 = vsel %vm881, %v481, 0
        %918 = vmatprep.subr.bf16.mxu0 0
        %919 = vmatpush1.bf16.msra.mxu0 %v783
        %920 = vmatprep.subr.bf16.mxu0 0
        %921 = vmatpush1.bf16.msra.mxu0 %v784
        %922 = vmatprep.subr.bf16.mxu0 0
        %923 = vmatpush1.bf16.msra.mxu0 %v785
        %924 = vmatprep.subr.bf16.mxu0 0
        %925 = vmatpush1.bf16.msra.mxu0 %v786
        %926 = vmatprep.subr.bf16.mxu0 0
        %927 = vmatpush1.bf16.msra.mxu0 %v787
        %928 = vmatprep.subr.bf16.mxu0 0
        %929 = vmatpush1.bf16.msra.mxu0 %v788
        %930 = vmatprep.subr.bf16.mxu0 0
        %931 = vmatpush1.bf16.msra.mxu0 %v789
        %932 = vmatprep.subr.bf16.mxu0 0
        %933 = vmatpush1.bf16.msra.mxu0 %v790
        %934 = vmatprep.subr.bf16.mxu0 0
        %935 = vmatpush1.bf16.msra.mxu0 %v791
        %936 = vmatprep.subr.bf16.mxu0 0
        %937 = vmatpush1.bf16.msra.mxu0 %v792
        %938 = vmatprep.subr.bf16.mxu0 0
        %939 = vmatpush1.bf16.msra.mxu0 %v793
        %940 = vmatprep.subr.bf16.mxu0 0
        %941 = vmatpush1.bf16.msra.mxu0 %v794
        %942 = vmatprep.subr.bf16.mxu0 0
        %943 = vmatpush1.bf16.msra.mxu0 %v795
        %944 = vmatprep.subr.bf16.mxu0 0
        %945 = vmatpush1.bf16.msra.mxu0 %v796
        %946 = vmatprep.subr.bf16.mxu0 0
        %947 = vmatpush1.bf16.msra.mxu0 %v797
        %948 = vmatprep.subr.bf16.mxu0 0
        %949 = vmatpush1.bf16.msra.mxu0 %v798
        %950 = vmatprep.mubr.bf16.mxu0 %v399
        %951 = vmatmul.mubr.bf16.gmra.mrb[0].mxu0 %v398
        %v952 = vpop.f32.mrb[0].mxu0
        %v953 = vadd.f32 %v585, %v952
        %v954 = vpop.f32.mrb[0].mxu0
        %v955 = vpop.f32.mrb[0].mxu0
        %v956 = vadd.f32 %v585, %v955
        %v957 = vpop.f32.mrb[0].mxu0
        %958 = vmatprep.mubr.bf16.mxu0 %v406
        %959 = vmatmul.mubr.bf16.gmra.mrb[0].mxu0 %v405
        %v960 = vpop.f32.mrb[0].mxu0
        %v961 = vadd.f32 %v585, %v960
        %v962 = vpop.f32.mrb[0].mxu0
        %v963 = vpop.f32.mrb[0].mxu0
        %v964 = vadd.f32 %v585, %v963
        %v965 = vpop.f32.mrb[0].mxu0
        %966 = vmatprep.mubr.bf16.mxu0 %v413
        %967 = vmatmul.mubr.bf16.gmra.mrb[0].mxu0 %v412
        %v968 = vpop.f32.mrb[0].mxu0
        %v969 = vadd.f32 %v585, %v968
        %v970 = vpop.f32.mrb[0].mxu0
        %v971 = vpop.f32.mrb[0].mxu0
        %v972 = vadd.f32 %v585, %v971
        %v973 = vpop.f32.mrb[0].mxu0
        %974 = vmatprep.mubr.bf16.mxu0 %v420
        %975 = vmatmul.mubr.bf16.gmra.mrb[0].mxu0 %v419
        %v976 = vpop.f32.mrb[0].mxu0
        %v977 = vadd.f32 %v585, %v976
        %v978 = vpop.f32.mrb[0].mxu0
        %v979 = vpop.f32.mrb[0].mxu0
        %v980 = vadd.f32 %v585, %v979
        %v981 = vpop.f32.mrb[0].mxu0
        %982 = vmatprep.mubr.bf16.mxu0 %v427
        %983 = vmatmul.mubr.bf16.gmra.mrb[0].mxu0 %v426
        %v984 = vpop.f32.mrb[0].mxu0
        %v985 = vadd.f32 %v585, %v984
        %v986 = vpop.f32.mrb[0].mxu0
        %v987 = vpop.f32.mrb[0].mxu0
        %v988 = vadd.f32 %v585, %v987
        %v989 = vpop.f32.mrb[0].mxu0
        %990 = vmatprep.mubr.bf16.mxu0 %v434
        %991 = vmatmul.mubr.bf16.gmra.mrb[0].mxu0 %v433
        %v992 = vpop.f32.mrb[0].mxu0
        %v993 = vadd.f32 %v585, %v992
        %v994 = vpop.f32.mrb[0].mxu0
        %v995 = vpop.f32.mrb[0].mxu0
        %v996 = vadd.f32 %v585, %v995
        %v997 = vpop.f32.mrb[0].mxu0
        %998 = vmatprep.mubr.bf16.mxu0 %v441
        %999 = vmatmul.mubr.bf16.gmra.mrb[0].mxu0 %v440
        %v1000 = vpop.f32.mrb[0].mxu0
        %v1001 = vadd.f32 %v585, %v1000
        %v1002 = vpop.f32.mrb[0].mxu0
        %v1003 = vpop.f32.mrb[0].mxu0
        %v1004 = vadd.f32 %v585, %v1003
        %v1005 = vpop.f32.mrb[0].mxu0
        %1006 = vmatprep.mubr.bf16.mxu0 %v448
        %1007 = vmatmul.mubr.bf16.gmra.mrb[0].mxu0 %v447
        %v1008 = vpop.f32.mrb[0].mxu0
        %v1009 = vadd.f32 %v585, %v1008
        %v1010 = vpop.f32.mrb[0].mxu0
        %v1011 = vpop.f32.mrb[0].mxu0
        %v1012 = vadd.f32 %v585, %v1011
        %v1013 = vpop.f32.mrb[0].mxu0
        %1014 = vmatprep.mubr.bf16.mxu0 %v455
        %1015 = vmatmul.mubr.bf16.gmra.mrb[0].mxu0 %v454
        %v1016 = vpop.f32.mrb[0].mxu0
        %v1017 = vadd.f32 %v585, %v1016
        %v1018 = vpop.f32.mrb[0].mxu0
        %v1019 = vpop.f32.mrb[0].mxu0
        %v1020 = vadd.f32 %v585, %v1019
        %v1021 = vpop.f32.mrb[0].mxu0
        %1022 = vmatprep.mubr.bf16.mxu0 %v462
        %1023 = vmatmul.mubr.bf16.gmra.mrb[0].mxu0 %v461
        %v1024 = vpop.f32.mrb[0].mxu0
        %v1025 = vadd.f32 %v585, %v1024
        %v1026 = vpop.f32.mrb[0].mxu0
        %v1027 = vpop.f32.mrb[0].mxu0
        %v1028 = vadd.f32 %v585, %v1027
        %v1029 = vpop.f32.mrb[0].mxu0
        %1030 = vmatprep.mubr.bf16.mxu0 %v469
        %1031 = vmatmul.mubr.bf16.gmra.mrb[0].mxu0 %v468
        %v1032 = vpop.f32.mrb[0].mxu0
        %v1033 = vadd.f32 %v585, %v1032
        %v1034 = vpop.f32.mrb[0].mxu0
        %v1035 = vpop.f32.mrb[0].mxu0
        %v1036 = vadd.f32 %v585, %v1035
        %v1037 = vpop.f32.mrb[0].mxu0
        %1038 = vmatprep.mubr.bf16.mxu0 %v476
        %1039 = vmatmul.mubr.bf16.gmra.mrb[0].mxu0 %v475
        %v1040 = vpop.f32.mrb[0].mxu0
        %v1041 = vadd.f32 %v585, %v1040
        %v1042 = vpop.f32.mrb[0].mxu0
        %v1043 = vpop.f32.mrb[0].mxu0
        %v1044 = vadd.f32 %v585, %v1043
        %v1045 = vpop.f32.mrb[0].mxu0
        %1046 = vdwg.mxu0
        %1047 = vmatprep.subr.bf16.mxu0 0
        %1048 = vmatpush1.bf16.msra.mxu0 %v799
        %1049 = vmatprep.subr.bf16.mxu0 0
        %1050 = vmatpush1.bf16.msra.mxu0 %v800
        %1051 = vmatprep.subr.bf16.mxu0 0
        %1052 = vmatpush1.bf16.msra.mxu0 %v801
        %1053 = vmatprep.subr.bf16.mxu0 0
        %1054 = vmatpush1.bf16.msra.mxu0 %v802
        %1055 = vmatprep.subr.bf16.mxu0 0
        %1056 = vmatpush1.bf16.msra.mxu0 %v803
        %1057 = vmatprep.subr.bf16.mxu0 0
        %1058 = vmatpush1.bf16.msra.mxu0 %v804
        %1059 = vmatprep.subr.bf16.mxu0 0
        %1060 = vmatpush1.bf16.msra.mxu0 %v805
        %1061 = vmatprep.subr.bf16.mxu0 0
        %1062 = vmatpush1.bf16.msra.mxu0 %v806
        %1063 = vmatprep.subr.bf16.mxu0 0
        %1064 = vmatpush1.bf16.msra.mxu0 %v807
        %1065 = vmatprep.subr.bf16.mxu0 0
        %1066 = vmatpush1.bf16.msra.mxu0 %v808
        %1067 = vmatprep.subr.bf16.mxu0 0
        %1068 = vmatpush1.bf16.msra.mxu0 %v809
        %1069 = vmatprep.subr.bf16.mxu0 0
        %1070 = vmatpush1.bf16.msra.mxu0 %v810
        %1071 = vmatprep.subr.bf16.mxu0 0
        %1072 = vmatpush1.bf16.msra.mxu0 %v811
        %1073 = vmatprep.subr.bf16.mxu0 0
        %1074 = vmatpush1.bf16.msra.mxu0 %v812
        %1075 = vmatprep.subr.bf16.mxu0 0
        %1076 = vmatpush1.bf16.msra.mxu0 %v813
        %1077 = vmatprep.subr.bf16.mxu0 0
        %1078 = vmatpush1.bf16.msra.mxu0 %v814
        %1079 = vmatprep.mubr.bf16.mxu0 %v401
        %1080 = vmatmul.mubr.bf16.gmra.mrb[0].mxu0 %v400
        %v1081 = vpop.f32.mrb[0].mxu0
        %v1082 = vadd.f32 %v953, %v1081
        %v1083 = vpop.f32.mrb[0].mxu0
        %v1084 = vpop.f32.mrb[0].mxu0
        %v1085 = vadd.f32 %v956, %v1084
        %v1086 = vpop.f32.mrb[0].mxu0
        %1087 = vmatprep.mubr.bf16.mxu0 %v408
        %1088 = vmatmul.mubr.bf16.gmra.mrb[0].mxu0 %v407
        %v1089 = vpop.f32.mrb[0].mxu0
        %v1090 = vadd.f32 %v961, %v1089
        %v1091 = vpop.f32.mrb[0].mxu0
        %v1092 = vpop.f32.mrb[0].mxu0
        %v1093 = vadd.f32 %v964, %v1092
        %v1094 = vpop.f32.mrb[0].mxu0
        %1095 = vmatprep.mubr.bf16.mxu0 %v415
        %1096 = vmatmul.mubr.bf16.gmra.mrb[0].mxu0 %v414
        %v1097 = vpop.f32.mrb[0].mxu0
        %v1098 = vadd.f32 %v969, %v1097
        %v1099 = vpop.f32.mrb[0].mxu0
        %v1100 = vpop.f32.mrb[0].mxu0
        %v1101 = vadd.f32 %v972, %v1100
        %v1102 = vpop.f32.mrb[0].mxu0
        %1103 = vmatprep.mubr.bf16.mxu0 %v422
        %1104 = vmatmul.mubr.bf16.gmra.mrb[0].mxu0 %v421
        %v1105 = vpop.f32.mrb[0].mxu0
        %v1106 = vadd.f32 %v977, %v1105
        %v1107 = vpop.f32.mrb[0].mxu0
        %v1108 = vpop.f32.mrb[0].mxu0
        %v1109 = vadd.f32 %v980, %v1108
        %v1110 = vpop.f32.mrb[0].mxu0
        %1111 = vmatprep.mubr.bf16.mxu0 %v429
        %1112 = vmatmul.mubr.bf16.gmra.mrb[0].mxu0 %v428
        %v1113 = vpop.f32.mrb[0].mxu0
        %v1114 = vadd.f32 %v985, %v1113
        %v1115 = vpop.f32.mrb[0].mxu0
        %v1116 = vpop.f32.mrb[0].mxu0
        %v1117 = vadd.f32 %v988, %v1116
        %v1118 = vpop.f32.mrb[0].mxu0
        %1119 = vmatprep.mubr.bf16.mxu0 %v436
        %1120 = vmatmul.mubr.bf16.gmra.mrb[0].mxu0 %v435
        %v1121 = vpop.f32.mrb[0].mxu0
        %v1122 = vadd.f32 %v993, %v1121
        %v1123 = vpop.f32.mrb[0].mxu0
        %v1124 = vpop.f32.mrb[0].mxu0
        %v1125 = vadd.f32 %v996, %v1124
        %v1126 = vpop.f32.mrb[0].mxu0
        %1127 = vmatprep.mubr.bf16.mxu0 %v443
        %1128 = vmatmul.mubr.bf16.gmra.mrb[0].mxu0 %v442
        %v1129 = vpop.f32.mrb[0].mxu0
        %v1130 = vadd.f32 %v1001, %v1129
        %v1131 = vpop.f32.mrb[0].mxu0
        %v1132 = vpop.f32.mrb[0].mxu0
        %v1133 = vadd.f32 %v1004, %v1132
        %v1134 = vpop.f32.mrb[0].mxu0
        %1135 = vmatprep.mubr.bf16.mxu0 %v450
        %1136 = vmatmul.mubr.bf16.gmra.mrb[0].mxu0 %v449
        %v1137 = vpop.f32.mrb[0].mxu0
        %v1138 = vadd.f32 %v1009, %v1137
        %v1139 = vpop.f32.mrb[0].mxu0
        %v1140 = vpop.f32.mrb[0].mxu0
        %v1141 = vadd.f32 %v1012, %v1140
        %v1142 = vpop.f32.mrb[0].mxu0
        %1143 = vmatprep.mubr.bf16.mxu0 %v457
        %1144 = vmatmul.mubr.bf16.gmra.mrb[0].mxu0 %v456
        %v1145 = vpop.f32.mrb[0].mxu0
        %v1146 = vadd.f32 %v1017, %v1145
        %v1147 = vpop.f32.mrb[0].mxu0
        %v1148 = vpop.f32.mrb[0].mxu0
        %v1149 = vadd.f32 %v1020, %v1148
        %v1150 = vpop.f32.mrb[0].mxu0
        %1151 = vmatprep.mubr.bf16.mxu0 %v464
        %1152 = vmatmul.mubr.bf16.gmra.mrb[0].mxu0 %v463
        %v1153 = vpop.f32.mrb[0].mxu0
        %v1154 = vadd.f32 %v1025, %v1153
        %v1155 = vpop.f32.mrb[0].mxu0
        %v1156 = vpop.f32.mrb[0].mxu0
        %v1157 = vadd.f32 %v1028, %v1156
        %v1158 = vpop.f32.mrb[0].mxu0
        %1159 = vmatprep.mubr.bf16.mxu0 %v471
        %1160 = vmatmul.mubr.bf16.gmra.mrb[0].mxu0 %v470
        %v1161 = vpop.f32.mrb[0].mxu0
        %v1162 = vadd.f32 %v1033, %v1161
        %v1163 = vpop.f32.mrb[0].mxu0
        %v1164 = vpop.f32.mrb[0].mxu0
        %v1165 = vadd.f32 %v1036, %v1164
        %v1166 = vpop.f32.mrb[0].mxu0
        %1167 = vmatprep.mubr.bf16.mxu0 %v478
        %1168 = vmatmul.mubr.bf16.gmra.mrb[0].mxu0 %v477
        %v1169 = vpop.f32.mrb[0].mxu0
        %v1170 = vadd.f32 %v1041, %v1169
        %v1171 = vpop.f32.mrb[0].mxu0
        %v1172 = vpop.f32.mrb[0].mxu0
        %v1173 = vadd.f32 %v1044, %v1172
        %v1174 = vpop.f32.mrb[0].mxu0
        %1175 = vdwg.mxu0
        %1176 = vmatprep.subr.bf16.mxu0 0
        %1177 = vmatpush1.bf16.msra.mxu0 %v815
        %1178 = vmatprep.subr.bf16.mxu0 0
        %1179 = vmatpush1.bf16.msra.mxu0 %v816
        %1180 = vmatprep.subr.bf16.mxu0 0
        %1181 = vmatpush1.bf16.msra.mxu0 %v817
        %1182 = vmatprep.subr.bf16.mxu0 0
        %1183 = vmatpush1.bf16.msra.mxu0 %v818
        %1184 = vmatprep.subr.bf16.mxu0 0
        %1185 = vmatpush1.bf16.msra.mxu0 %v819
        %1186 = vmatprep.subr.bf16.mxu0 0
        %1187 = vmatpush1.bf16.msra.mxu0 %v820
        %1188 = vmatprep.subr.bf16.mxu0 0
        %1189 = vmatpush1.bf16.msra.mxu0 %v821
        %1190 = vmatprep.subr.bf16.mxu0 0
        %1191 = vmatpush1.bf16.msra.mxu0 %v822
        %1192 = vmatprep.subr.bf16.mxu0 0
        %1193 = vmatpush1.bf16.msra.mxu0 %v823
        %1194 = vmatprep.subr.bf16.mxu0 0
        %1195 = vmatpush1.bf16.msra.mxu0 %v824
        %1196 = vmatprep.subr.bf16.mxu0 0
        %1197 = vmatpush1.bf16.msra.mxu0 %v825
        %1198 = vmatprep.subr.bf16.mxu0 0
        %1199 = vmatpush1.bf16.msra.mxu0 %v826
        %1200 = vmatprep.subr.bf16.mxu0 0
        %1201 = vmatpush1.bf16.msra.mxu0 %v827
        %1202 = vmatprep.subr.bf16.mxu0 0
        %1203 = vmatpush1.bf16.msra.mxu0 %v828
        %1204 = vmatprep.subr.bf16.mxu0 0
        %1205 = vmatpush1.bf16.msra.mxu0 %v829
        %1206 = vmatprep.subr.bf16.mxu0 0
        %1207 = vmatpush1.bf16.msra.mxu0 %v830
        %1208 = vmatprep.mubr.bf16.mxu0 %v403
        %1209 = vmatmul.mubr.bf16.gmra.mrb[0].mxu0 %v402
        %v1210 = vpop.f32.mrb[0].mxu0
        %v1211 = vadd.f32 %v1082, %v1210
        %v1212 = vpop.f32.mrb[0].mxu0
        %v1213 = vpop.f32.mrb[0].mxu0
        %v1214 = vadd.f32 %v1085, %v1213
        %v1215 = vpop.f32.mrb[0].mxu0
        %1216 = vmatprep.mubr.bf16.mxu0 %v410
        %1217 = vmatmul.mubr.bf16.gmra.mrb[0].mxu0 %v409
        %v1218 = vpop.f32.mrb[0].mxu0
        %v1219 = vadd.f32 %v1090, %v1218
        %v1220 = vpop.f32.mrb[0].mxu0
        %v1221 = vpop.f32.mrb[0].mxu0
        %v1222 = vadd.f32 %v1093, %v1221
        %v1223 = vpop.f32.mrb[0].mxu0
        %1224 = vmatprep.mubr.bf16.mxu0 %v417
        %1225 = vmatmul.mubr.bf16.gmra.mrb[0].mxu0 %v416
        %v1226 = vpop.f32.mrb[0].mxu0
        %v1227 = vadd.f32 %v1098, %v1226
        %v1228 = vpop.f32.mrb[0].mxu0
        %v1229 = vpop.f32.mrb[0].mxu0
        %v1230 = vadd.f32 %v1101, %v1229
        %v1231 = vpop.f32.mrb[0].mxu0
        %1232 = vmatprep.mubr.bf16.mxu0 %v424
        %1233 = vmatmul.mubr.bf16.gmra.mrb[0].mxu0 %v423
        %v1234 = vpop.f32.mrb[0].mxu0
        %v1235 = vadd.f32 %v1106, %v1234
        %v1236 = vpop.f32.mrb[0].mxu0
        %v1237 = vpop.f32.mrb[0].mxu0
        %v1238 = vadd.f32 %v1109, %v1237
        %v1239 = vpop.f32.mrb[0].mxu0
        %1240 = vmatprep.mubr.bf16.mxu0 %v431
        %1241 = vmatmul.mubr.bf16.gmra.mrb[0].mxu0 %v430
        %v1242 = vpop.f32.mrb[0].mxu0
        %v1243 = vadd.f32 %v1114, %v1242
        %v1244 = vpop.f32.mrb[0].mxu0
        %v1245 = vpop.f32.mrb[0].mxu0
        %v1246 = vadd.f32 %v1117, %v1245
        %v1247 = vpop.f32.mrb[0].mxu0
        %1248 = vmatprep.mubr.bf16.mxu0 %v438
        %1249 = vmatmul.mubr.bf16.gmra.mrb[0].mxu0 %v437
        %v1250 = vpop.f32.mrb[0].mxu0
        %v1251 = vadd.f32 %v1122, %v1250
        %v1252 = vpop.f32.mrb[0].mxu0
        %v1253 = vpop.f32.mrb[0].mxu0
        %v1254 = vadd.f32 %v1125, %v1253
        %v1255 = vpop.f32.mrb[0].mxu0
        %1256 = vmatprep.mubr.bf16.mxu0 %v445
        %1257 = vmatmul.mubr.bf16.gmra.mrb[0].mxu0 %v444
        %v1258 = vpop.f32.mrb[0].mxu0
        %v1259 = vadd.f32 %v1130, %v1258
        %v1260 = vpop.f32.mrb[0].mxu0
        %v1261 = vpop.f32.mrb[0].mxu0
        %v1262 = vadd.f32 %v1133, %v1261
        %v1263 = vpop.f32.mrb[0].mxu0
        %1264 = vmatprep.mubr.bf16.mxu0 %v452
        %1265 = vmatmul.mubr.bf16.gmra.mrb[0].mxu0 %v451
        %v1266 = vpop.f32.mrb[0].mxu0
        %v1267 = vadd.f32 %v1138, %v1266
        %v1268 = vpop.f32.mrb[0].mxu0
        %v1269 = vpop.f32.mrb[0].mxu0
        %v1270 = vadd.f32 %v1141, %v1269
        %v1271 = vpop.f32.mrb[0].mxu0
        %1272 = vmatprep.mubr.bf16.mxu0 %v459
        %1273 = vmatmul.mubr.bf16.gmra.mrb[0].mxu0 %v458
        %v1274 = vpop.f32.mrb[0].mxu0
        %v1275 = vadd.f32 %v1146, %v1274
        %v1276 = vpop.f32.mrb[0].mxu0
        %v1277 = vpop.f32.mrb[0].mxu0
        %v1278 = vadd.f32 %v1149, %v1277
        %v1279 = vpop.f32.mrb[0].mxu0
        %1280 = vmatprep.mubr.bf16.mxu0 %v466
        %1281 = vmatmul.mubr.bf16.gmra.mrb[0].mxu0 %v465
        %v1282 = vpop.f32.mrb[0].mxu0
        %v1283 = vadd.f32 %v1154, %v1282
        %v1284 = vpop.f32.mrb[0].mxu0
        %v1285 = vpop.f32.mrb[0].mxu0
        %v1286 = vadd.f32 %v1157, %v1285
        %v1287 = vpop.f32.mrb[0].mxu0
        %1288 = vmatprep.mubr.bf16.mxu0 %v473
        %1289 = vmatmul.mubr.bf16.gmra.mrb[0].mxu0 %v472
        %v1290 = vpop.f32.mrb[0].mxu0
        %v1291 = vadd.f32 %v1162, %v1290
        %v1292 = vpop.f32.mrb[0].mxu0
        %v1293 = vpop.f32.mrb[0].mxu0
        %v1294 = vadd.f32 %v1165, %v1293
        %v1295 = vpop.f32.mrb[0].mxu0
        %1296 = vmatprep.mubr.bf16.mxu0 %v480
        %1297 = vmatmul.mubr.bf16.gmra.mrb[0].mxu0 %v479
        %v1298 = vpop.f32.mrb[0].mxu0
        %v1299 = vadd.f32 %v1170, %v1298
        %v1300 = vpop.f32.mrb[0].mxu0
        %v1301 = vpop.f32.mrb[0].mxu0
        %v1302 = vadd.f32 %v1173, %v1301
        %v1303 = vpop.f32.mrb[0].mxu0
        %1304 = vdwg.mxu0
        %1305 = vmatprep.subr.bf16.mxu0 0
        %1306 = vmatpush1.bf16.msra.mxu0 %v831
        %1307 = vmatprep.subr.bf16.mxu0 0
        %1308 = vmatpush1.bf16.msra.mxu0 0
        %1309 = vmatprep.subr.bf16.mxu0 0
        %1310 = vmatpush1.bf16.msra.mxu0 0
        %1311 = vmatprep.subr.bf16.mxu0 0
        %1312 = vmatpush1.bf16.msra.mxu0 0
        %1313 = vmatprep.subr.bf16.mxu0 0
        %1314 = vmatpush1.bf16.msra.mxu0 0
        %1315 = vmatprep.subr.bf16.mxu0 0
        %1316 = vmatpush1.bf16.msra.mxu0 0
        %1317 = vmatprep.subr.bf16.mxu0 0
        %1318 = vmatpush1.bf16.msra.mxu0 0
        %1319 = vmatprep.subr.bf16.mxu0 0
        %1320 = vmatpush1.bf16.msra.mxu0 0
        %1321 = vmatprep.subr.bf16.mxu0 0
        %1322 = vmatpush1.bf16.msra.mxu0 0
        %1323 = vmatprep.subr.bf16.mxu0 0
        %1324 = vmatpush1.bf16.msra.mxu0 0
        %1325 = vmatprep.subr.bf16.mxu0 0
        %1326 = vmatpush1.bf16.msra.mxu0 0
        %1327 = vmatprep.subr.bf16.mxu0 0
        %1328 = vmatpush1.bf16.msra.mxu0 0
        %1329 = vmatprep.subr.bf16.mxu0 0
        %1330 = vmatpush1.bf16.msra.mxu0 0
        %1331 = vmatprep.subr.bf16.mxu0 0
        %1332 = vmatpush1.bf16.msra.mxu0 0
        %1333 = vmatprep.subr.bf16.mxu0 0
        %1334 = vmatpush1.bf16.msra.mxu0 0
        %1335 = vmatprep.subr.bf16.mxu0 0
        %1336 = vmatpush1.bf16.msra.mxu0 0
        %1337 = vmatprep.mubr.bf16.mxu0 0
        %1338 = vmatmul.mubr.bf16.gmra.mrb[0].mxu0 %v883
        %v1339 = vpop.f32.mrb[0].mxu0
        %v1340 = vadd.f32 %v1211, %v1339
        %v1341 = vpop.f32.mrb[0].mxu0
        %v1342 = vpop.f32.mrb[0].mxu0
        %v1343 = vadd.f32 %v1214, %v1342
        %v1344 = vpop.f32.mrb[0].mxu0
        %1345 = vmatprep.mubr.bf16.mxu0 0
        %1346 = vmatmul.mubr.bf16.gmra.mrb[0].mxu0 %v886
        %v1347 = vpop.f32.mrb[0].mxu0
        %v1348 = vadd.f32 %v1219, %v1347
        %v1349 = vpop.f32.mrb[0].mxu0
        %v1350 = vpop.f32.mrb[0].mxu0
        %v1351 = vadd.f32 %v1222, %v1350
        %v1352 = vpop.f32.mrb[0].mxu0
        %1353 = vmatprep.mubr.bf16.mxu0 0
        %1354 = vmatmul.mubr.bf16.gmra.mrb[0].mxu0 %v889
        %v1355 = vpop.f32.mrb[0].mxu0
        %v1356 = vadd.f32 %v1227, %v1355
        %v1357 = vpop.f32.mrb[0].mxu0
        %v1358 = vpop.f32.mrb[0].mxu0
        %v1359 = vadd.f32 %v1230, %v1358
        %v1360 = vpop.f32.mrb[0].mxu0
        %1361 = vmatprep.mubr.bf16.mxu0 0
        %1362 = vmatmul.mubr.bf16.gmra.mrb[0].mxu0 %v892
        %v1363 = vpop.f32.mrb[0].mxu0
        %v1364 = vadd.f32 %v1235, %v1363
        %v1365 = vpop.f32.mrb[0].mxu0
        %v1366 = vpop.f32.mrb[0].mxu0
        %v1367 = vadd.f32 %v1238, %v1366
        %v1368 = vpop.f32.mrb[0].mxu0
        %1369 = vmatprep.mubr.bf16.mxu0 0
        %1370 = vmatmul.mubr.bf16.gmra.mrb[0].mxu0 %v895
        %v1371 = vpop.f32.mrb[0].mxu0
        %v1372 = vadd.f32 %v1243, %v1371
        %v1373 = vpop.f32.mrb[0].mxu0
        %v1374 = vpop.f32.mrb[0].mxu0
        %v1375 = vadd.f32 %v1246, %v1374
        %v1376 = vpop.f32.mrb[0].mxu0
        %1377 = vmatprep.mubr.bf16.mxu0 0
        %1378 = vmatmul.mubr.bf16.gmra.mrb[0].mxu0 %v898
        %v1379 = vpop.f32.mrb[0].mxu0
        %v1380 = vadd.f32 %v1251, %v1379
        %v1381 = vpop.f32.mrb[0].mxu0
        %v1382 = vpop.f32.mrb[0].mxu0
        %v1383 = vadd.f32 %v1254, %v1382
        %v1384 = vpop.f32.mrb[0].mxu0
        %1385 = vmatprep.mubr.bf16.mxu0 0
        %1386 = vmatmul.mubr.bf16.gmra.mrb[0].mxu0 %v901
        %v1387 = vpop.f32.mrb[0].mxu0
        %v1388 = vadd.f32 %v1259, %v1387
        %v1389 = vpop.f32.mrb[0].mxu0
        %v1390 = vpop.f32.mrb[0].mxu0
        %v1391 = vadd.f32 %v1262, %v1390
        %v1392 = vpop.f32.mrb[0].mxu0
        %1393 = vmatprep.mubr.bf16.mxu0 0
        %1394 = vmatmul.mubr.bf16.gmra.mrb[0].mxu0 %v904
        %v1395 = vpop.f32.mrb[0].mxu0
        %v1396 = vadd.f32 %v1267, %v1395
        %v1397 = vpop.f32.mrb[0].mxu0
        %v1398 = vpop.f32.mrb[0].mxu0
        %v1399 = vadd.f32 %v1270, %v1398
        %v1400 = vpop.f32.mrb[0].mxu0
        %1401 = vmatprep.mubr.bf16.mxu0 0
        %1402 = vmatmul.mubr.bf16.gmra.mrb[0].mxu0 %v907
        %v1403 = vpop.f32.mrb[0].mxu0
        %v1404 = vadd.f32 %v1275, %v1403
        %v1405 = vpop.f32.mrb[0].mxu0
        %v1406 = vpop.f32.mrb[0].mxu0
        %v1407 = vadd.f32 %v1278, %v1406
        %v1408 = vpop.f32.mrb[0].mxu0
        %1409 = vmatprep.mubr.bf16.mxu0 0
        %1410 = vmatmul.mubr.bf16.gmra.mrb[0].mxu0 %v910
        %v1411 = vpop.f32.mrb[0].mxu0
        %v1412 = vadd.f32 %v1283, %v1411
        %v1413 = vpop.f32.mrb[0].mxu0
        %v1414 = vpop.f32.mrb[0].mxu0
        %v1415 = vadd.f32 %v1286, %v1414
        %v1416 = vpop.f32.mrb[0].mxu0
        %1417 = vmatprep.mubr.bf16.mxu0 0
        %1418 = vmatmul.mubr.bf16.gmra.mrb[0].mxu0 %v913
        %v1419 = vpop.f32.mrb[0].mxu0
        %v1420 = vadd.f32 %v1291, %v1419
        %v1421 = vpop.f32.mrb[0].mxu0
        %v1422 = vpop.f32.mrb[0].mxu0
        %v1423 = vadd.f32 %v1294, %v1422
        %v1424 = vpop.f32.mrb[0].mxu0
        %1425 = vmatprep.mubr.bf16.mxu0 0
        %1426 = vmatmul.mubr.bf16.gmra.mrb[0].mxu0 %v916
        %v1427 = vpop.f32.mrb[0].mxu0
        %v1428 = vadd.f32 %v1299, %v1427
        %v1429 = vpop.f32.mrb[0].mxu0
        %v1430 = vpop.f32.mrb[0].mxu0
        %v1431 = vadd.f32 %v1302, %v1430
        %v1432 = vpop.f32.mrb[0].mxu0
        %1433 = vdwg.mxu0
        %v1434 = vmax.f32 %v1340, 0.0
        %v1435 = vmax.f32 %v1343, 0.0
        %v1436 = vmax.f32 %v1348, 0.0
        %v1437 = vmax.f32 %v1351, 0.0
        %v1438 = vmax.f32 %v1356, 0.0
        %v1439 = vmax.f32 %v1359, 0.0
        %v1440 = vmax.f32 %v1364, 0.0
        %v1441 = vmax.f32 %v1367, 0.0
        %v1442 = vmax.f32 %v1372, 0.0
        %v1443 = vmax.f32 %v1375, 0.0
        %v1444 = vmax.f32 %v1380, 0.0
        %v1445 = vmax.f32 %v1383, 0.0
        %v1446 = vmax.f32 %v1388, 0.0
        %v1447 = vmax.f32 %v1391, 0.0
        %v1448 = vmax.f32 %v1396, 0.0
        %v1449 = vmax.f32 %v1399, 0.0
        %v1450 = vmax.f32 %v1404, 0.0
        %v1451 = vmax.f32 %v1407, 0.0
        %v1452 = vmax.f32 %v1412, 0.0
        %v1453 = vmax.f32 %v1415, 0.0
        %v1454 = vmax.f32 %v1420, 0.0
        %v1455 = vmax.f32 %v1423, 0.0
        %v1456 = vmax.f32 %v1428, 0.0
        %v1457 = vmax.f32 %v1431, 0.0
        %v1458 = vpack.c.bf16 %v1435, %v1434
        %v1459 = vpack.c.bf16 %v1437, %v1436
        %v1460 = vpack.c.bf16 %v1439, %v1438
        %v1461 = vpack.c.bf16 %v1441, %v1440
        %v1462 = vpack.c.bf16 %v1443, %v1442
        %v1463 = vpack.c.bf16 %v1445, %v1444
        %v1464 = vpack.c.bf16 %v1447, %v1446
        %v1465 = vpack.c.bf16 %v1449, %v1448
        %v1466 = vpack.c.bf16 %v1451, %v1450
        %v1467 = vpack.c.bf16 %v1453, %v1452
        %v1468 = vpack.c.bf16 %v1455, %v1454
        %v1469 = vpack.c.bf16 %v1457, %v1456
        %v1470 = vld [vmem:[%s3] sm:$0xf]
        %v1471 = vld [vmem:[%s3 + $0x4] sm:$0xf]
        %v1472 = vld [vmem:[%s3 + $0x8] sm:$0xf]
        %v1473 = vld [vmem:[%s3 + $0xc] sm:$0xf]
        %v1474 = vld [vmem:[%s3 + $0x10] sm:$0xf]
        %v1475 = vld [vmem:[%s3 + $0x14] sm:$0xf]
        %v1476 = vld [vmem:[%s3 + $0x18] sm:$0xf]
        %v1477 = vld [vmem:[%s3 + $0x1c] sm:$0xf]
        %v1478 = vld [vmem:[%s3 + $0x20] sm:$0xf]
        %v1479 = vld [vmem:[%s3 + $0x24] sm:$0xf]
        %v1480 = vld [vmem:[%s3 + $0x28] sm:$0xf]
        %v1481 = vld [vmem:[%s3 + $0x2c] sm:$0xf]
        %v1482 = vld [vmem:[%s3 + $0x30] sm:$0xf]
        %v1483 = vld [vmem:[%s3 + $0x34] sm:$0xf]
        %v1484 = vld [vmem:[%s3 + $0x38] sm:$0xf]
        %v1485 = vld [vmem:[%s3 + $0x3c] sm:$0xf]
        %v1486 = vld [vmem:[%s4] sm:$0x1]
        %v1488 = vlaneseq
        %v1489 = vshrl.u32 %v1488, 7
        %v1490 = vsub.s32 0, %v1489
        %v1491 = vrot.slane %v1486, %v1490
        %v1509 = vunpack.c.l.b16 %v1470
        %v1510 = vunpack.c.l.b16 %v1471
        %v1511 = vunpack.c.l.b16 %v1472
        %v1512 = vunpack.c.l.b16 %v1473
        %v1513 = vunpack.c.l.b16 %v1474
        %v1514 = vunpack.c.l.b16 %v1475
        %v1515 = vunpack.c.l.b16 %v1476
        %v1516 = vunpack.c.l.b16 %v1477
        %v1517 = vunpack.c.l.b16 %v1478
        %v1518 = vunpack.c.l.b16 %v1479
        %v1519 = vunpack.c.l.b16 %v1480
        %v1520 = vunpack.c.l.b16 %v1481
        %v1521 = vunpack.c.l.b16 %v1482
        %v1522 = vunpack.c.l.b16 %v1483
        %v1523 = vunpack.c.l.b16 %v1484
        %v1524 = vunpack.c.l.b16 %v1485
        %v1525 = vpack.c.b16 %v1510, %v1509
        %v1526 = vpack.c.b16 %v1512, %v1511
        %v1527 = vpack.c.b16 %v1514, %v1513
        %v1528 = vpack.c.b16 %v1516, %v1515
        %v1529 = vpack.c.b16 %v1518, %v1517
        %v1530 = vpack.c.b16 %v1520, %v1519
        %v1531 = vpack.c.b16 %v1522, %v1521
        %v1532 = vpack.c.b16 %v1524, %v1523
        %1541 = vmatprep.subr.bf16.mxu0 0
        %1542 = vmatpush1.bf16.msra.mxu0 %v1525
        %1543 = vmatprep.subr.bf16.mxu0 0
        %1544 = vmatpush1.bf16.msra.mxu0 %v1526
        %1545 = vmatprep.subr.bf16.mxu0 0
        %1546 = vmatpush1.bf16.msra.mxu0 %v1527
        %1547 = vmatprep.subr.bf16.mxu0 0
        %1548 = vmatpush1.bf16.msra.mxu0 %v1528
        %1549 = vmatprep.subr.bf16.mxu0 0
        %1550 = vmatpush1.bf16.msra.mxu0 %v1529
        %1551 = vmatprep.subr.bf16.mxu0 0
        %1552 = vmatpush1.bf16.msra.mxu0 %v1530
        %1553 = vmatprep.subr.bf16.mxu0 0
        %1554 = vmatpush1.bf16.msra.mxu0 %v1531
        %1555 = vmatprep.subr.bf16.mxu0 0
        %1556 = vmatpush1.bf16.msra.mxu0 %v1532
        %1557 = vmatprep.subr.bf16.mxu0 0
        %1558 = vmatpush1.bf16.msra.mxu0 0
        %1559 = vmatprep.subr.bf16.mxu0 0
        %1560 = vmatpush1.bf16.msra.mxu0 0
        %1561 = vmatprep.subr.bf16.mxu0 0
        %1562 = vmatpush1.bf16.msra.mxu0 0
        %1563 = vmatprep.subr.bf16.mxu0 0
        %1564 = vmatpush1.bf16.msra.mxu0 0
        %1565 = vmatprep.subr.bf16.mxu0 0
        %1566 = vmatpush1.bf16.msra.mxu0 0
        %1567 = vmatprep.subr.bf16.mxu0 0
        %1568 = vmatpush1.bf16.msra.mxu0 0
        %1569 = vmatprep.subr.bf16.mxu0 0
        %1570 = vmatpush1.bf16.msra.mxu0 0
        %1571 = vmatprep.subr.bf16.mxu0 0
        %1572 = vmatpush1.bf16.msra.mxu0 0
        %1573 = vmatprep.mubr.bf16.mxu0 0
        %1574 = vmatmul.mubr.bf16.gmra.mrb[0].mxu0 %v1458
        %v1575 = vpop.f32.mrb[0].mxu0
        %v1576 = vadd.f32 %v1491, %v1575
        %v1577 = vpop.f32.mrb[0].mxu0
        %v1578 = vpop.f32.mrb[0].mxu0
        %v1579 = vadd.f32 %v1491, %v1578
        %v1580 = vpop.f32.mrb[0].mxu0
        %1581 = vmatprep.mubr.bf16.mxu0 0
        %1582 = vmatmul.mubr.bf16.gmra.mrb[0].mxu0 %v1459
        %v1583 = vpop.f32.mrb[0].mxu0
        %v1584 = vadd.f32 %v1491, %v1583
        %v1585 = vpop.f32.mrb[0].mxu0
        %v1586 = vpop.f32.mrb[0].mxu0
        %v1587 = vadd.f32 %v1491, %v1586
        %v1588 = vpop.f32.mrb[0].mxu0
        %1589 = vmatprep.mubr.bf16.mxu0 0
        %1590 = vmatmul.mubr.bf16.gmra.mrb[0].mxu0 %v1460
        %v1591 = vpop.f32.mrb[0].mxu0
        %v1592 = vadd.f32 %v1491, %v1591
        %v1593 = vpop.f32.mrb[0].mxu0
        %v1594 = vpop.f32.mrb[0].mxu0
        %v1595 = vadd.f32 %v1491, %v1594
        %v1596 = vpop.f32.mrb[0].mxu0
        %1597 = vmatprep.mubr.bf16.mxu0 0
        %1598 = vmatmul.mubr.bf16.gmra.mrb[0].mxu0 %v1461
        %v1599 = vpop.f32.mrb[0].mxu0
        %v1600 = vadd.f32 %v1491, %v1599
        %v1601 = vpop.f32.mrb[0].mxu0
        %v1602 = vpop.f32.mrb[0].mxu0
        %v1603 = vadd.f32 %v1491, %v1602
        %v1604 = vpop.f32.mrb[0].mxu0
        %1605 = vmatprep.mubr.bf16.mxu0 0
        %1606 = vmatmul.mubr.bf16.gmra.mrb[0].mxu0 %v1462
        %v1607 = vpop.f32.mrb[0].mxu0
        %v1608 = vadd.f32 %v1491, %v1607
        %v1609 = vpop.f32.mrb[0].mxu0
        %v1610 = vpop.f32.mrb[0].mxu0
        %v1611 = vadd.f32 %v1491, %v1610
        %v1612 = vpop.f32.mrb[0].mxu0
        %1613 = vmatprep.mubr.bf16.mxu0 0
        %1614 = vmatmul.mubr.bf16.gmra.mrb[0].mxu0 %v1463
        %v1615 = vpop.f32.mrb[0].mxu0
        %v1616 = vadd.f32 %v1491, %v1615
        %v1617 = vpop.f32.mrb[0].mxu0
        %v1618 = vpop.f32.mrb[0].mxu0
        %v1619 = vadd.f32 %v1491, %v1618
        %v1620 = vpop.f32.mrb[0].mxu0
        %1621 = vmatprep.mubr.bf16.mxu0 0
        %1622 = vmatmul.mubr.bf16.gmra.mrb[0].mxu0 %v1464
        %v1623 = vpop.f32.mrb[0].mxu0
        %v1624 = vadd.f32 %v1491, %v1623
        %v1625 = vpop.f32.mrb[0].mxu0
        %v1626 = vpop.f32.mrb[0].mxu0
        %v1627 = vadd.f32 %v1491, %v1626
        %v1628 = vpop.f32.mrb[0].mxu0
        %1629 = vmatprep.mubr.bf16.mxu0 0
        %1630 = vmatmul.mubr.bf16.gmra.mrb[0].mxu0 %v1465
        %v1631 = vpop.f32.mrb[0].mxu0
        %v1632 = vadd.f32 %v1491, %v1631
        %v1633 = vpop.f32.mrb[0].mxu0
        %v1634 = vpop.f32.mrb[0].mxu0
        %v1635 = vadd.f32 %v1491, %v1634
        %v1636 = vpop.f32.mrb[0].mxu0
        %1637 = vmatprep.mubr.bf16.mxu0 0
        %1638 = vmatmul.mubr.bf16.gmra.mrb[0].mxu0 %v1466
        %v1639 = vpop.f32.mrb[0].mxu0
        %v1640 = vadd.f32 %v1491, %v1639
        %v1641 = vpop.f32.mrb[0].mxu0
        %v1642 = vpop.f32.mrb[0].mxu0
        %v1643 = vadd.f32 %v1491, %v1642
        %v1644 = vpop.f32.mrb[0].mxu0
        %1645 = vmatprep.mubr.bf16.mxu0 0
        %1646 = vmatmul.mubr.bf16.gmra.mrb[0].mxu0 %v1467
        %v1647 = vpop.f32.mrb[0].mxu0
        %v1648 = vadd.f32 %v1491, %v1647
        %v1649 = vpop.f32.mrb[0].mxu0
        %v1650 = vpop.f32.mrb[0].mxu0
        %v1651 = vadd.f32 %v1491, %v1650
        %v1652 = vpop.f32.mrb[0].mxu0
        %1653 = vmatprep.mubr.bf16.mxu0 0
        %1654 = vmatmul.mubr.bf16.gmra.mrb[0].mxu0 %v1468
        %v1655 = vpop.f32.mrb[0].mxu0
        %v1656 = vadd.f32 %v1491, %v1655
        %v1657 = vpop.f32.mrb[0].mxu0
        %v1658 = vpop.f32.mrb[0].mxu0
        %v1659 = vadd.f32 %v1491, %v1658
        %v1660 = vpop.f32.mrb[0].mxu0
        %1661 = vmatprep.mubr.bf16.mxu0 0
        %1662 = vmatmul.mubr.bf16.gmra.mrb[0].mxu0 %v1469
        %v1663 = vpop.f32.mrb[0].mxu0
        %v1664 = vadd.f32 %v1491, %v1663
        %v1665 = vpop.f32.mrb[0].mxu0
        %v1666 = vpop.f32.mrb[0].mxu0
        %v1667 = vadd.f32 %v1491, %v1666
        %v1668 = vpop.f32.mrb[0].mxu0
        %1669 = vdwg.mxu0
        %1670 = vst [vmem:[%s220] sm:$0xff] %v1576
        %1671 = vst [vmem:[%s220 + $0x8] sm:$0xff] %v1579
        %1672 = vst [vmem:[%s220 + $0x10] sm:$0xff] %v1584
        %1673 = vst [vmem:[%s220 + $0x18] sm:$0xff] %v1587
        %1674 = vst [vmem:[%s220 + $0x20] sm:$0xff] %v1592
        %1675 = vst [vmem:[%s220 + $0x28] sm:$0xff] %v1595
        %1676 = vst [vmem:[%s220 + $0x30] sm:$0xff] %v1600
        %1677 = vst [vmem:[%s220 + $0x38] sm:$0xff] %v1603
        %1678 = vst [vmem:[%s220 + $0x40] sm:$0xff] %v1608
        %1679 = vst [vmem:[%s220 + $0x48] sm:$0xff] %v1611
        %1680 = vst [vmem:[%s220 + $0x50] sm:$0xff] %v1616
        %1681 = vst [vmem:[%s220 + $0x58] sm:$0xff] %v1619
        %1682 = vst [vmem:[%s220 + $0x60] sm:$0xff] %v1624
        %1683 = vst [vmem:[%s220 + $0x68] sm:$0xff] %v1627
        %1684 = vst [vmem:[%s220 + $0x70] sm:$0xff] %v1632
        %1685 = vst [vmem:[%s220 + $0x78] sm:$0xff] %v1635
        %1686 = vst [vmem:[%s220 + $0x80] sm:$0xff] %v1640
        %1687 = vst [vmem:[%s220 + $0x88] sm:$0xff] %v1643
        %1688 = vst [vmem:[%s220 + $0x90] sm:$0xff] %v1648
        %1689 = vst [vmem:[%s220 + $0x98] sm:$0xff] %v1651
        %1690 = vst [vmem:[%s220 + $0xa0] sm:$0xff] %v1656
        %1691 = vst [vmem:[%s220 + $0xa8] sm:$0xff] %v1659
        %1692 = vst [vmem:[%s220 + $0xb0] sm:$0xff] %v1664
        %1693 = vst [vmem:[%s220 + $0xb8] sm:$0xff] %v1667
        %s1694 = sand.u32 %s137, 1
        %s1695 = scalar_lea.sflag [#allocation3], %s1694
        %s1696 = sand.u32 %s137, 1
        %s1697 = smul.addr %s1696, 192
        %s1698 = scalar_lea.vmem [#allocation2], %s1697
        // Predicated region
        $region41: #{tpu_custom_call.1} parent=39 // pred_check
          %p1699 = pneg %p147
        $region42: #{tpu_custom_call.1} parent=39 // pred_check_branch
          %1701 = sbr.rel (%p1699) target = $region44
        $region43: #{tpu_custom_call.1} parent=39 // pred_region
          %s1702 = smul.u32 24, %s19
          %s1704 = ssub.s32 3072, 3072
          %1705 = vsyncadd %s1695, %s1704
          %s1706 = smul.addr %s1702, 128
          %s1707 = scalar_lea.hbm %s5, %s1706
          %s1708 = sshll.u32 %s1698, 4
          %s1709 = int_to_ptr.vmem [resolvable:$true] %s1708
          %1714 = dma.vmem_to_hbm [thread:$0]  %s1709, 3072, %s1707, %s1695, 128, 128, 8
        $region44: #{tpu_custom_call.1} parent=39 // pred_fallthru
          _
      $region40: #{tpu_custom_call.1} parent=5 // pred_fallthru
        _
      %p1715 = scmp.le.s32.totalorder 2, %s14
      // Predicated region
      $region45: #{tpu_custom_call.1} parent=5 // pred_check
        %p1716 = pneg %p1715
      $region46: #{tpu_custom_call.1} parent=5 // pred_check_branch
        %1718 = sbr.rel (%p1716) target = $region48
      $region47: #{tpu_custom_call.1} parent=5 // pred_region
        %s1719 = ssub.s32 %s14, 2
        // Predicated region
        $region49: #{tpu_custom_call.1} parent=47 // pred_check
          %p1720 = pneg %p153
        $region50: #{tpu_custom_call.1} parent=47 // pred_check_branch
          %1722 = sbr.rel (%p1720) target = $region52
        $region51: #{tpu_custom_call.1} parent=47 // pred_region
          %s1723 = sand.u32 %s138, 1
          %s1724 = scalar_lea.sflag [#allocation3], %s1723
          %s1725 = sand.u32 %s138, 1
          %s1726 = smul.addr %s1725, 192
          %s1727 = scalar_lea.vmem [#allocation2], %s1726
          %1728 = dma.done %s1724, 3072
        $region52: #{tpu_custom_call.1} parent=47 // pred_fallthru
          _
      $region48: #{tpu_custom_call.1} parent=5 // pred_fallthru
        _
    $region6: #{tpu_custom_call.1} parent=1 // loop_footer
      %s18 = sadd.s32 1, %s14
    $region7: #{tpu_custom_call.1} parent=1 // loop_footer_branch
      %13 = sbr.rel target = $region3
    $region8: #{tpu_custom_call.1} parent=1 // loop_exit
      _
    %1729 = vsyncpa [#allocation3], 1
    %s1730 = scalar_lea.sflag [#allocation3], 1
    %1731 = vsyncpa %s1730, 1

</llo_original>
